<compile_context>
chip_gen: v6e
topology: v6e:2x2x1
jax: 0.10.0
libtpu: 0.0.40
codegen_flags: <defaults>
</compile_context>

<pallas_src>
import jax
import jax.numpy as jnp
from jax.experimental import pallas as pl
from jax.experimental.pallas import tpu as pltpu


def _disc_resnet_kernel(x_ref, w1_ref, b1_ref, w2_ref, b2_ref, wf_ref, bf_ref, out_ref):
    """One batch tile of the full forward pass.

    x_ref : [TB, F]  f32 (current batch tile)
    w1_ref, w2_ref : [F, F] bf16 (fc2 weights of block 1 / 2, transposed, VMEM-resident)
    b1_ref, b2_ref : [1, F]  f32
    wf_ref : [1, F]  f32 (head weight, transposed)   bf_ref : [1] f32 in SMEM
    out_ref: [TB, 1]
    """
    x = x_ref[...].astype(jnp.float32)

    # MappingBlock 1: out = fc2(x) + x (identity residual; fc1+ReLU is dead compute)
    h1 = (
        jnp.dot(x.astype(jnp.bfloat16), w1_ref[...], preferred_element_type=jnp.float32)
        + b1_ref[...]
        + x
    )

    # MappingBlock 2: out = fc2(h1) + h1
    h2 = (
        jnp.dot(h1.astype(jnp.bfloat16), w2_ref[...], preferred_element_type=jnp.float32)
        + b2_ref[...]
        + h1
    )

    # Head Linear(F, 1): mul + lane reduction on VPU/XLU instead of an N=1 MXU matmul.
    y = jnp.sum(h2 * wf_ref[...], axis=-1, keepdims=True) + bf_ref[0]
    out_ref[...] = y.astype(out_ref.dtype)


def discriminator_resnet_forward(x, params, *, tile_b=256):
    """x: [B, F] float32. params: dict of pre-transposed weights/biases."""
    B, F = x.shape
    tile_b = min(tile_b, B)
    if B % tile_b != 0:
        # Keep blocks exact; fall back to a single whole-batch block for odd sizes.
        tile_b = B
    grid = (B // tile_b,)

    # VMEM budgeting: resident bf16 weights + x/h1/h2 tiles (+ double buffering slack).
    weight_bytes = 2 * F * F * 2
    act_bytes = 8 * tile_b * F * 4
    compiler_kwargs = dict(dimension_semantics=("parallel",))
    vmem_need = weight_bytes + act_bytes
    if vmem_need > 32 * 1024 * 1024:
        compiler_kwargs["vmem_limit_bytes"] = min(vmem_need + (8 << 20), 64 * 1024 * 1024)

    cost = pl.CostEstimate(
        flops=4 * B * F * F + 4 * B * F,      # two [B,F]x[F,F] matmuls + head reduce
        transcendentals=0,
        bytes_accessed=weight_bytes + (3 * F + 1) * 4 + B * F * 4 + B * 4,
    )

    return pl.pallas_call(
        _disc_resnet_kernel,
        out_shape=jax.ShapeDtypeStruct((B, 1), x.dtype),
        grid=grid,
        in_specs=[
            pl.BlockSpec((tile_b, F), lambda i: (i, 0)),        # x batch tile
            pl.BlockSpec((F, F), lambda i: (0, 0)),             # w2_1 (VMEM-resident)
            pl.BlockSpec((1, F), lambda i: (0, 0)),             # b2_1
            pl.BlockSpec((F, F), lambda i: (0, 0)),             # w2_2 (VMEM-resident)
            pl.BlockSpec((1, F), lambda i: (0, 0)),             # b2_2
            pl.BlockSpec((1, F), lambda i: (0, 0)),             # w_fc as [1, F]
            pl.BlockSpec(memory_space=pltpu.MemorySpace.SMEM),  # b_fc scalar
        ],
        out_specs=pl.BlockSpec((tile_b, 1), lambda i: (i, 0)),
        compiler_params=pltpu.CompilerParams(**compiler_kwargs),
        cost_estimate=cost,
    )(
        x,
        params["w2_1"], params["b2_1"],
        params["w2_2"], params["b2_2"],
        params["w_fc"], params["b_fc"],
    )


def init_params(key, num_features):
    """Deterministic init mimicking PyTorch Linear default (uniform +-1/sqrt(fan_in))."""
    F = num_features
    ks = jax.random.split(key, 6)
    bound = 1.0 / (F ** 0.5)

    def u(k, shape, b, dtype=jnp.float32):
        return jax.random.uniform(k, shape, jnp.float32, minval=-b, maxval=b).astype(dtype)

    return {
        # block 1 fc2 (stored [in, out] = transposed PyTorch layout), bf16 for the MXU
        "w2_1": u(ks[0], (F, F), bound, jnp.bfloat16),
        "b2_1": u(ks[1], (1, F), bound),
        # block 2 fc2
        "w2_2": u(ks[2], (F, F), bound, jnp.bfloat16),
        "b2_2": u(ks[3], (1, F), bound),
        # final fc: Linear(F, 1) stored as [1, F] row + scalar bias
        "w_fc": u(ks[4], (1, F), bound),
        "b_fc": u(ks[5], (1,), bound),
    }


def reference_forward(x, params):
    """Pure-JAX reference with identical (bf16-matmul, f32-accumulate) semantics."""
    h1 = (
        jnp.dot(x.astype(jnp.bfloat16), params["w2_1"], preferred_element_type=jnp.float32)
        + params["b2_1"]
        + x
    )
    h2 = (
        jnp.dot(h1.astype(jnp.bfloat16), params["w2_2"], preferred_element_type=jnp.float32)
        + params["b2_2"]
        + h1
    )
    return jnp.sum(h2 * params["w_fc"], axis=-1, keepdims=True) + params["b_fc"][0]


if __name__ == "__main__":
    # num_in_planes == num_features so the (ill-typed in the reference) downsample is None.
    # B is a multiple of TILE_B so the batch grid runs 2 steps and exercises the pipeline.
    B, F = 512, 256
    key = jax.random.PRNGKey(0)
    kx, kp = jax.random.split(key)

    x = jax.random.normal(kx, (B, F), jnp.float32)
    params = init_params(kp, F)

    y = discriminator_resnet_forward(x, params)
    y = jax.block_until_ready(y)

    y_ref = reference_forward(x, params)
    assert y.shape == (B, 1)
    assert jnp.allclose(y, y_ref, atol=5e-3, rtol=5e-3), "mismatch vs reference"

    print("KERNEL_OK")
</pallas_src>

<mosaic_0001>
module attributes {stable_mosaic.version = 11 : i64} {
  func.func @_disc_resnet_kernel(%arg0: i32, %arg1: memref<256x256xf32, #tpu.memory_space<vmem>>, %arg2: memref<256x256xbf16, #tpu.memory_space<vmem>>, %arg3: memref<1x256xf32, #tpu.memory_space<vmem>>, %arg4: memref<256x256xbf16, #tpu.memory_space<vmem>>, %arg5: memref<1x256xf32, #tpu.memory_space<vmem>>, %arg6: memref<1x256xf32, #tpu.memory_space<vmem>>, %arg7: memref<1xf32, #tpu.memory_space<smem>>, %arg8: memref<256x1xf32, #tpu.memory_space<vmem>>) attributes {dimension_semantics = [#tpu.dimension_semantics<parallel>], iteration_bounds = array<i64: 2>, scalar_prefetch = 0 : i64, scratch_operands = 0 : i64, tpu.core_type = #tpu.core_type<tc>, window_params = [{transform_indices = @transform_0, window_bounds = array<i64: 256, 256>}, {pipeline_mode = #tpu.pipeline_mode<synchronous>, transform_indices = @transform_1, window_bounds = array<i64: 256, 256>}, {pipeline_mode = #tpu.pipeline_mode<synchronous>, transform_indices = @transform_2, window_bounds = array<i64: 1, 256>}, {pipeline_mode = #tpu.pipeline_mode<synchronous>, transform_indices = @transform_3, window_bounds = array<i64: 256, 256>}, {pipeline_mode = #tpu.pipeline_mode<synchronous>, transform_indices = @transform_4, window_bounds = array<i64: 1, 256>}, {pipeline_mode = #tpu.pipeline_mode<synchronous>, transform_indices = @transform_5, window_bounds = array<i64: 1, 256>}, {transform_indices = @transform_6, window_bounds = array<i64: 1>}, {transform_indices = @transform_7, window_bounds = array<i64: 256, 1>}]} {
    %c0 = arith.constant 0 : index
    %c0_0 = arith.constant 0 : index
    %0 = vector.load %arg1[%c0, %c0_0] : memref<256x256xf32, #tpu.memory_space<vmem>>, vector<256x256xf32>
    %1 = arith.truncf %0 : vector<256x256xf32> to vector<256x256xbf16>
    %c0_1 = arith.constant 0 : index
    %c0_2 = arith.constant 0 : index
    %2 = vector.load %arg2[%c0_1, %c0_2] : memref<256x256xbf16, #tpu.memory_space<vmem>>, vector<256x256xbf16>
    %cst = arith.constant dense<0.000000e+00> : vector<256x256xf32>
    %3 = tpu.matmul %1, %2, %cst {dimension_numbers = #tpu.dot_dimension_numbers<[1], [0], [0], [1], [0, 0, 1, 1], [], []>} : vector<256x256xbf16>, vector<256x256xbf16>, vector<256x256xf32> -> vector<256x256xf32>
    %c0_3 = arith.constant 0 : index
    %c0_4 = arith.constant 0 : index
    %4 = vector.load %arg3[%c0_3, %c0_4] : memref<1x256xf32, #tpu.memory_space<vmem>>, vector<1x256xf32>
    %5 = vector.broadcast %4 : vector<1x256xf32> to vector<256x256xf32>
    %6 = arith.addf %3, %5 : vector<256x256xf32>
    %7 = arith.addf %6, %0 : vector<256x256xf32>
    %8 = arith.truncf %7 : vector<256x256xf32> to vector<256x256xbf16>
    %c0_5 = arith.constant 0 : index
    %c0_6 = arith.constant 0 : index
    %9 = vector.load %arg4[%c0_5, %c0_6] : memref<256x256xbf16, #tpu.memory_space<vmem>>, vector<256x256xbf16>
    %cst_7 = arith.constant dense<0.000000e+00> : vector<256x256xf32>
    %10 = tpu.matmul %8, %9, %cst_7 {dimension_numbers = #tpu.dot_dimension_numbers<[1], [0], [0], [1], [0, 0, 1, 1], [], []>} : vector<256x256xbf16>, vector<256x256xbf16>, vector<256x256xf32> -> vector<256x256xf32>
    %c0_8 = arith.constant 0 : index
    %c0_9 = arith.constant 0 : index
    %11 = vector.load %arg5[%c0_8, %c0_9] : memref<1x256xf32, #tpu.memory_space<vmem>>, vector<1x256xf32>
    %12 = vector.broadcast %11 : vector<1x256xf32> to vector<256x256xf32>
    %13 = arith.addf %10, %12 : vector<256x256xf32>
    %14 = arith.addf %13, %7 : vector<256x256xf32>
    %c0_10 = arith.constant 0 : index
    %c0_11 = arith.constant 0 : index
    %15 = vector.load %arg6[%c0_10, %c0_11] : memref<1x256xf32, #tpu.memory_space<vmem>>, vector<1x256xf32>
    %16 = vector.broadcast %15 : vector<1x256xf32> to vector<256x256xf32>
    %17 = arith.mulf %14, %16 : vector<256x256xf32>
    %cst_12 = arith.constant dense<0.000000e+00> : vector<256xf32>
    %18 = vector.multi_reduction <add>, %17, %cst_12 [1] : vector<256x256xf32> to vector<256xf32>
    %19 = vector.shape_cast %18 : vector<256xf32> to vector<256x1xf32>
    %c0_13 = arith.constant 0 : index
    %20 = memref.load %arg7[%c0_13] : memref<1xf32, #tpu.memory_space<smem>>
    %21 = vector.broadcast %20 : f32 to vector<256x1xf32>
    %22 = arith.addf %19, %21 : vector<256x1xf32>
    %c0_14 = arith.constant 0 : index
    %c0_15 = arith.constant 0 : index
    %23 = vector.load %arg8[%c0_14, %c0_15] : memref<256x1xf32, #tpu.memory_space<vmem>>, vector<256x1xf32>
    tpu.vector_store %arg8[%c0_14, %c0_15], %22 {strides = array<i32>} : memref<256x1xf32, #tpu.memory_space<vmem>>, vector<256x1xf32>,
    return
  }
  func.func @transform_0(%arg0: i32) -> (i32, i32) {
    %c0_i32 = arith.constant 0 : i32
    %c0_i32_0 = arith.constant 0 : i32
    return %arg0, %c0_i32 : i32, i32
  }
  func.func @transform_1(%arg0: i32) -> (i32, i32) {
    %c0_i32 = arith.constant 0 : i32
    %c0_i32_0 = arith.constant 0 : i32
    %c0_i32_1 = arith.constant 0 : i32
    return %c0_i32, %c0_i32_0 : i32, i32
  }
  func.func @transform_2(%arg0: i32) -> (i32, i32) {
    %c0_i32 = arith.constant 0 : i32
    %c0_i32_0 = arith.constant 0 : i32
    %c0_i32_1 = arith.constant 0 : i32
    return %c0_i32, %c0_i32_0 : i32, i32
  }
  func.func @transform_3(%arg0: i32) -> (i32, i32) {
    %c0_i32 = arith.constant 0 : i32
    %c0_i32_0 = arith.constant 0 : i32
    %c0_i32_1 = arith.constant 0 : i32
    return %c0_i32, %c0_i32_0 : i32, i32
  }
  func.func @transform_4(%arg0: i32) -> (i32, i32) {
    %c0_i32 = arith.constant 0 : i32
    %c0_i32_0 = arith.constant 0 : i32
    %c0_i32_1 = arith.constant 0 : i32
    return %c0_i32, %c0_i32_0 : i32, i32
  }
  func.func @transform_5(%arg0: i32) -> (i32, i32) {
    %c0_i32 = arith.constant 0 : i32
    %c0_i32_0 = arith.constant 0 : i32
    %c0_i32_1 = arith.constant 0 : i32
    return %c0_i32, %c0_i32_0 : i32, i32
  }
  func.func @transform_6(%arg0: i32) -> i32 {
    %c0_i32 = arith.constant 0 : i32
    %c0_i32_0 = arith.constant 0 : i32
    return %c0_i32 : i32
  }
  func.func @transform_7(%arg0: i32) -> (i32, i32) {
    %c0_i32 = arith.constant 0 : i32
    %c0_i32_0 = arith.constant 0 : i32
    return %arg0, %c0_i32 : i32, i32
  }
}

</mosaic_0001>

<llo_original>
// kernel: tpu_custom_call.1
$region0: #{tpu_custom_call.1}
  #allocation0 [shape = 'u32[]', space=smem, size = 0x4, offset = 0x4, fixed_abs, tag = 'smem constant byte address 0x4 - core index']
  #allocation1 [shape = 'u32[144,128]{1,0:T(1,128)}', space=vmem, size = 0x12000, scoped, tag = 'internal scratch']
  #allocation2 [shape = 'f32[1]{0:T(128)S(6)}', space=smem, size = 0x200, scoped, tag = 'scoped memory for tpu_custom_call.1']
  %s0 = inlined_call_operand.hbm [shape: f32[512,256], index: 0, kind: input, shape index: {}]
  %s1 = inlined_call_operand.hbm [shape: bf16[256,256], index: 1, kind: input, shape index: {}]
  %s2 = inlined_call_operand.vmem [shape: f32[1,256], index: 2, kind: input, shape index: {}]
  %s3 = inlined_call_operand.hbm [shape: bf16[256,256], index: 3, kind: input, shape index: {}]
  %s4 = inlined_call_operand.vmem [shape: f32[1,256], index: 4, kind: input, shape index: {}]
  %s5 = inlined_call_operand.vmem [shape: f32[1,256], index: 5, kind: input, shape index: {}]
  %s6 = inlined_call_operand.<no memory space> [shape: f32[1], index: 6, kind: input, shape index: {}]
  %s7 = inlined_call_operand.vmem [shape: f32[512,1], index: 7, kind: output, shape index: {}]
  %s8 = sld [smem:[#allocation0]]
  $region73: #{tpu_custom_call.1} parent=0
    _
  %s10 = ssub.s32 1, %s8
  %s11 = scalar_select 0, %s10, %s8
  %12 = sst [smem:[#allocation2]] %s6
  $region1: #{tpu_custom_call.1} parent=0
    #allocation3 [shape = 'u8[524288]{0}', space=vmem, size = 0x80000, scoped, tag = 'input window, operand 0']
    #allocation4 [shape = 's32[2]{0}', space=sflag, size = 0x8, scoped, tag = 'scoped memory for tpu_custom_call.1']
    #allocation5 [shape = 'u8[131072]{0}', space=vmem, size = 0x20000, scoped, tag = 'input window, operand 1, single buffered']
    #allocation6 [shape = 's32[1]{0}', space=sflag, size = 0x4, scoped, tag = 'scoped memory for tpu_custom_call.1']
    #allocation7 [shape = 'u8[131072]{0}', space=vmem, size = 0x20000, scoped, tag = 'input window, operand 3, single buffered']
    %13 = vsyncpa [#allocation4], 0
    %s14 = scalar_lea.sflag [#allocation4], 1
    %15 = vsyncpa %s14, 0
    %16 = vsyncpa [#allocation6], 0
    loop: start=0, step=1, limit=4
    $region2: #{tpu_custom_call.1} parent=1 // loop_pre_header
      _
    $region3: #{tpu_custom_call.1} parent=1 // loop_header
      %s18 = sphi 0, %s22
      %p19 = scmp.ge.s32.totalorder %s18, 4
      %s28 = sphi 0, %s30
      %s31 = sphi 0, %s28
      %s32 = sphi 0, %s31
      %s48 = sphi 0, %s32
      %s52 = sphi 0, %s52
      %s54 = sphi 0, %s52
      %s55 = sphi 0, %s54
      %s69 = sphi 0, %s55
      %s73 = sphi 0, %s73
      %s75 = sphi 0, %s73
      %s76 = sphi 0, %s75
      %s90 = sphi 0, %s76
      %s94 = sphi 0, %s94
      %s96 = sphi 0, %s94
      %s97 = sphi 0, %s96
      %s111 = sphi 0, %s97
      %s115 = sphi 0, %s115
      %s117 = sphi 0, %s115
      %s118 = sphi 0, %s117
      %s132 = sphi 0, %s118
      %s136 = sphi 0, %s136
      %s138 = sphi 0, %s136
      %s139 = sphi 0, %s138
      %s153 = sphi 0, %s139
      %s157 = sphi 0, %s157
      %s159 = sphi 0, %s157
      %s160 = sphi 0, %s159
      %s174 = sphi 0, %s160
      %s180 = sphi 0, %s182
      %s183 = sphi 0, %s180
      %s184 = sphi 0, %s183
      %s200 = sphi 0, %s184
    $region4: #{tpu_custom_call.1} parent=1 // loop_header_branch
      %21 = sbr.rel (%p19) target = $region8
    $region5: #{tpu_custom_call.1} parent=1 // loop_body
      %s23 = ssub.s32 %s18, 1
      %s24 = ssub.s32 %s18, 2
      %s25 = sadd.s32 %s18, 1
      %s26 = ssub.s32 %s18, %s25
      %p27 = scmp.eq.s32.totalorder %s26, 0
      %s29 = sadd.s32 %s28, 1
      %s30 = scalar_select %p27, %s28, %s29
      %p33 = pneg %p27
      %p34 = scmp.eq.s32.totalorder %s18, 1
      %p35 = por %p33, %p34
      %p36 = scmp.ne.s32.totalorder %s28, %s31
      %p37 = scmp.eq.s32.totalorder %s18, 0
      %p38 = por %p36, %p37
      %p39 = scmp.ne.s32.totalorder %s28, %s31
      %p40 = scmp.eq.s32.totalorder %s23, 1
      %p41 = por %p39, %p40
      %p42 = scmp.ne.s32.totalorder %s31, %s32
      %p43 = scmp.eq.s32.totalorder %s23, 0
      %p44 = por %p42, %p43
      %p45 = scmp.ne.s32.totalorder %s31, %s32
      %p46 = scmp.eq.s32.totalorder %s24, 1
      %p47 = por %p45, %p46
      %p49 = scmp.ne.s32.totalorder %s32, %s48
      %p50 = scmp.eq.s32.totalorder %s24, 0
      %p51 = por %p49, %p50
      %s53 = sadd.s32 %s52, 1
      %p56 = scmp.eq.s32.totalorder %s18, 1
      %p57 = scmp.ne.s32.totalorder %s52, %s54
      %p58 = scmp.eq.s32.totalorder %s18, 0
      %p59 = por %p57, %p58
      %p60 = scmp.ne.s32.totalorder %s52, %s54
      %p61 = scmp.eq.s32.totalorder %s23, 1
      %p62 = por %p60, %p61
      %p63 = scmp.ne.s32.totalorder %s54, %s55
      %p64 = scmp.eq.s32.totalorder %s23, 0
      %p65 = por %p63, %p64
      %p66 = scmp.ne.s32.totalorder %s54, %s55
      %p67 = scmp.eq.s32.totalorder %s24, 1
      %p68 = por %p66, %p67
      %p70 = scmp.ne.s32.totalorder %s55, %s69
      %p71 = scmp.eq.s32.totalorder %s24, 0
      %p72 = por %p70, %p71
      %s74 = sadd.s32 %s73, 1
      %p77 = scmp.eq.s32.totalorder %s18, 1
      %p78 = scmp.ne.s32.totalorder %s73, %s75
      %p79 = scmp.eq.s32.totalorder %s18, 0
      %p80 = por %p78, %p79
      %p81 = scmp.ne.s32.totalorder %s73, %s75
      %p82 = scmp.eq.s32.totalorder %s23, 1
      %p83 = por %p81, %p82
      %p84 = scmp.ne.s32.totalorder %s75, %s76
      %p85 = scmp.eq.s32.totalorder %s23, 0
      %p86 = por %p84, %p85
      %p87 = scmp.ne.s32.totalorder %s75, %s76
      %p88 = scmp.eq.s32.totalorder %s24, 1
      %p89 = por %p87, %p88
      %p91 = scmp.ne.s32.totalorder %s76, %s90
      %p92 = scmp.eq.s32.totalorder %s24, 0
      %p93 = por %p91, %p92
      %s95 = sadd.s32 %s94, 1
      %p98 = scmp.eq.s32.totalorder %s18, 1
      %p99 = scmp.ne.s32.totalorder %s94, %s96
      %p100 = scmp.eq.s32.totalorder %s18, 0
      %p101 = por %p99, %p100
      %p102 = scmp.ne.s32.totalorder %s94, %s96
      %p103 = scmp.eq.s32.totalorder %s23, 1
      %p104 = por %p102, %p103
      %p105 = scmp.ne.s32.totalorder %s96, %s97
      %p106 = scmp.eq.s32.totalorder %s23, 0
      %p107 = por %p105, %p106
      %p108 = scmp.ne.s32.totalorder %s96, %s97
      %p109 = scmp.eq.s32.totalorder %s24, 1
      %p110 = por %p108, %p109
      %p112 = scmp.ne.s32.totalorder %s97, %s111
      %p113 = scmp.eq.s32.totalorder %s24, 0
      %p114 = por %p112, %p113
      %s116 = sadd.s32 %s115, 1
      %p119 = scmp.eq.s32.totalorder %s18, 1
      %p120 = scmp.ne.s32.totalorder %s115, %s117
      %p121 = scmp.eq.s32.totalorder %s18, 0
      %p122 = por %p120, %p121
      %p123 = scmp.ne.s32.totalorder %s115, %s117
      %p124 = scmp.eq.s32.totalorder %s23, 1
      %p125 = por %p123, %p124
      %p126 = scmp.ne.s32.totalorder %s117, %s118
      %p127 = scmp.eq.s32.totalorder %s23, 0
      %p128 = por %p126, %p127
      %p129 = scmp.ne.s32.totalorder %s117, %s118
      %p130 = scmp.eq.s32.totalorder %s24, 1
      %p131 = por %p129, %p130
      %p133 = scmp.ne.s32.totalorder %s118, %s132
      %p134 = scmp.eq.s32.totalorder %s24, 0
      %p135 = por %p133, %p134
      %s137 = sadd.s32 %s136, 1
      %p140 = scmp.eq.s32.totalorder %s18, 1
      %p141 = scmp.ne.s32.totalorder %s136, %s138
      %p142 = scmp.eq.s32.totalorder %s18, 0
      %p143 = por %p141, %p142
      %p144 = scmp.ne.s32.totalorder %s136, %s138
      %p145 = scmp.eq.s32.totalorder %s23, 1
      %p146 = por %p144, %p145
      %p147 = scmp.ne.s32.totalorder %s138, %s139
      %p148 = scmp.eq.s32.totalorder %s23, 0
      %p149 = por %p147, %p148
      %p150 = scmp.ne.s32.totalorder %s138, %s139
      %p151 = scmp.eq.s32.totalorder %s24, 1
      %p152 = por %p150, %p151
      %p154 = scmp.ne.s32.totalorder %s139, %s153
      %p155 = scmp.eq.s32.totalorder %s24, 0
      %p156 = por %p154, %p155
      %s158 = sadd.s32 %s157, 1
      %p161 = scmp.eq.s32.totalorder %s18, 1
      %p162 = scmp.ne.s32.totalorder %s157, %s159
      %p163 = scmp.eq.s32.totalorder %s18, 0
      %p164 = por %p162, %p163
      %p165 = scmp.ne.s32.totalorder %s157, %s159
      %p166 = scmp.eq.s32.totalorder %s23, 1
      %p167 = por %p165, %p166
      %p168 = scmp.ne.s32.totalorder %s159, %s160
      %p169 = scmp.eq.s32.totalorder %s23, 0
      %p170 = por %p168, %p169
      %p171 = scmp.ne.s32.totalorder %s159, %s160
      %p172 = scmp.eq.s32.totalorder %s24, 1
      %p173 = por %p171, %p172
      %p175 = scmp.ne.s32.totalorder %s160, %s174
      %p176 = scmp.eq.s32.totalorder %s24, 0
      %p177 = por %p175, %p176
      %s178 = ssub.s32 %s18, %s25
      %p179 = scmp.eq.s32.totalorder %s178, 0
      %s181 = sadd.s32 %s180, 1
      %s182 = scalar_select %p179, %s180, %s181
      %p185 = pneg %p179
      %p186 = scmp.eq.s32.totalorder %s18, 1
      %p187 = por %p185, %p186
      %p188 = scmp.ne.s32.totalorder %s180, %s183
      %p189 = scmp.eq.s32.totalorder %s18, 0
      %p190 = por %p188, %p189
      %p191 = scmp.ne.s32.totalorder %s180, %s183
      %p192 = scmp.eq.s32.totalorder %s23, 1
      %p193 = por %p191, %p192
      %p194 = scmp.ne.s32.totalorder %s183, %s184
      %p195 = scmp.eq.s32.totalorder %s23, 0
      %p196 = por %p194, %p195
      %p197 = scmp.ne.s32.totalorder %s183, %s184
      %p198 = scmp.eq.s32.totalorder %s24, 1
      %p199 = por %p197, %p198
      %p201 = scmp.ne.s32.totalorder %s184, %s200
      %p202 = scmp.eq.s32.totalorder %s24, 0
      %p203 = por %p201, %p202
      %p204 = scmp.le.s32.totalorder 1, %s18
      %p205 = scmp.lt.s32.totalorder %s18, 3
      %p206 = pnand %p204, %p205
      %p207 = pneg %p206
      // Predicated region
      $region9: #{tpu_custom_call.1} parent=5 // pred_check
        _
      $region10: #{tpu_custom_call.1} parent=5 // pred_check_branch
        %209 = sbr.rel (%p206) target = $region12
      $region11: #{tpu_custom_call.1} parent=5 // pred_region
        %s210 = ssub.s32 %s18, 1
        // Predicated region
        $region13: #{tpu_custom_call.1} parent=11 // pred_check
          %p211 = pneg %p65
        $region14: #{tpu_custom_call.1} parent=11 // pred_check_branch
          %213 = sbr.rel (%p211) target = $region16
        $region15: #{tpu_custom_call.1} parent=11 // pred_region
          %s215 = ssub.s32 4096, 4096
          %216 = vsyncadd [#allocation6], %s215
          %s217 = sshll.u32 [#allocation5], 4
          %s218 = int_to_ptr.vmem [resolvable:$true] %s217
          %223 = dma.hbm_to_vmem [thread:$0]  %s1, 4096, %s218, [#allocation6], 128, 128, 8
        $region16: #{tpu_custom_call.1} parent=11 // pred_fallthru
          _
        // Predicated region
        $region17: #{tpu_custom_call.1} parent=11 // pred_check
          %p224 = pneg %p86
        $region18: #{tpu_custom_call.1} parent=11 // pred_check_branch
          %226 = sbr.rel (%p224) target = $region20
        $region19: #{tpu_custom_call.1} parent=11 // pred_region
          _
        $region20: #{tpu_custom_call.1} parent=11 // pred_fallthru
          _
        // Predicated region
        $region21: #{tpu_custom_call.1} parent=11 // pred_check
          %p227 = pneg %p107
        $region22: #{tpu_custom_call.1} parent=11 // pred_check_branch
          %229 = sbr.rel (%p227) target = $region24
        $region23: #{tpu_custom_call.1} parent=11 // pred_region
          %s231 = ssub.s32 4096, 4096
          %232 = vsyncadd [#allocation6], %s231
          %s233 = sshll.u32 [#allocation7], 4
          %s234 = int_to_ptr.vmem [resolvable:$true] %s233
          %239 = dma.hbm_to_vmem [thread:$0]  %s3, 4096, %s234, [#allocation6], 128, 128, 8
        $region24: #{tpu_custom_call.1} parent=11 // pred_fallthru
          _
        // Predicated region
        $region25: #{tpu_custom_call.1} parent=11 // pred_check
          %p240 = pneg %p128
        $region26: #{tpu_custom_call.1} parent=11 // pred_check_branch
          %242 = sbr.rel (%p240) target = $region28
        $region27: #{tpu_custom_call.1} parent=11 // pred_region
          _
        $region28: #{tpu_custom_call.1} parent=11 // pred_fallthru
          _
        // Predicated region
        $region29: #{tpu_custom_call.1} parent=11 // pred_check
          %p243 = pneg %p149
        $region30: #{tpu_custom_call.1} parent=11 // pred_check_branch
          %245 = sbr.rel (%p243) target = $region32
        $region31: #{tpu_custom_call.1} parent=11 // pred_region
          _
        $region32: #{tpu_custom_call.1} parent=11 // pred_fallthru
          _
        // Predicated region
        $region33: #{tpu_custom_call.1} parent=11 // pred_check
          %p246 = pneg %p170
        $region34: #{tpu_custom_call.1} parent=11 // pred_check_branch
          %248 = sbr.rel (%p246) target = $region36
        $region35: #{tpu_custom_call.1} parent=11 // pred_region
          _
        $region36: #{tpu_custom_call.1} parent=11 // pred_fallthru
          _
      $region12: #{tpu_custom_call.1} parent=5 // pred_fallthru
        _
      %p249 = scmp.lt.s32.totalorder %s18, 2
      // Predicated region
      $region37: #{tpu_custom_call.1} parent=5 // pred_check
        %p250 = pneg %p249
      $region38: #{tpu_custom_call.1} parent=5 // pred_check_branch
        %252 = sbr.rel (%p250) target = $region40
      $region39: #{tpu_custom_call.1} parent=5 // pred_region
        // Predicated region
        $region41: #{tpu_custom_call.1} parent=39 // pred_check
          %p253 = pneg %p38
        $region42: #{tpu_custom_call.1} parent=39 // pred_check_branch
          %255 = sbr.rel (%p253) target = $region44
        $region43: #{tpu_custom_call.1} parent=39 // pred_region
          %s256 = sand.u32 %s28, 1
          %s257 = scalar_lea.sflag [#allocation4], %s256
          %s258 = sand.u32 %s28, 1
          %s259 = smul.addr %s258, 512
          %s260 = scalar_lea.vmem [#allocation3], %s259
          %s261 = smul.u32 32, %s18
          %s263 = ssub.s32 8192, 8192
          %264 = vsyncadd %s257, %s263
          %s265 = smul.addr %s261, 2
          %s266 = smul.addr %s265, 128
          %s267 = scalar_lea.hbm %s0, %s266
          %s268 = sshll.u32 %s260, 4
          %s269 = int_to_ptr.vmem [resolvable:$true] %s268
          %274 = dma.hbm_to_vmem [thread:$0]  %s267, 8192, %s269, %s257, 256, 256, 16
        $region44: #{tpu_custom_call.1} parent=39 // pred_fallthru
          _
      $region40: #{tpu_custom_call.1} parent=5 // pred_fallthru
        _
      %p275 = scmp.le.s32.totalorder 1, %s18
      %p276 = scmp.lt.s32.totalorder %s18, 3
      %p277 = pnand %p275, %p276
      %p278 = pneg %p277
      // Predicated region
      $region45: #{tpu_custom_call.1} parent=5 // pred_check
        _
      $region46: #{tpu_custom_call.1} parent=5 // pred_check_branch
        %280 = sbr.rel (%p277) target = $region48
      $region47: #{tpu_custom_call.1} parent=5 // pred_region
        %s281 = ssub.s32 %s18, 1
        %s282 = sand.u32 %s31, 1
        %s283 = scalar_lea.sflag [#allocation4], %s282
        %s284 = sand.u32 %s31, 1
        %s285 = smul.addr %s284, 512
        %s286 = scalar_lea.vmem [#allocation3], %s285
        // Predicated region
        $region49: #{tpu_custom_call.1} parent=47 // pred_check
          %p287 = pneg %p44
        $region50: #{tpu_custom_call.1} parent=47 // pred_check_branch
          %289 = sbr.rel (%p287) target = $region52
        $region51: #{tpu_custom_call.1} parent=47 // pred_region
          %290 = dma.done %s283, 8192
        $region52: #{tpu_custom_call.1} parent=47 // pred_fallthru
          _
        // Predicated region
        $region53: #{tpu_custom_call.1} parent=47 // pred_check
          %p291 = pneg %p65
        $region54: #{tpu_custom_call.1} parent=47 // pred_check_branch
          %293 = sbr.rel (%p291) target = $region56
        $region55: #{tpu_custom_call.1} parent=47 // pred_region
          %294 = dma.done [#allocation6], 4096
        $region56: #{tpu_custom_call.1} parent=47 // pred_fallthru
          _
        // Predicated region
        $region57: #{tpu_custom_call.1} parent=47 // pred_check
          %p295 = pneg %p107
        $region58: #{tpu_custom_call.1} parent=47 // pred_check_branch
          %297 = sbr.rel (%p295) target = $region60
        $region59: #{tpu_custom_call.1} parent=47 // pred_region
          %298 = dma.done [#allocation6], 4096
        $region60: #{tpu_custom_call.1} parent=47 // pred_fallthru
          _
        %s299 = sand.u32 %s31, 1
        %s300 = scalar_lea.sflag [#allocation4], %s299
        %s301 = sand.u32 %s31, 1
        %s302 = smul.addr %s301, 512
        %s303 = scalar_lea.vmem [#allocation3], %s302
        %p304 = pneg %p44
        %p305 = pneg %p41
        %p306 = pneg %p65
        %p307 = pneg %p62
        %p308 = pneg %p86
        %p309 = pneg %p83
        %p310 = pneg %p107
        %p311 = pneg %p104
        %p312 = pneg %p128
        %p313 = pneg %p125
        %p314 = pneg %p149
        %p315 = pneg %p146
        %p316 = pneg %p170
        %p317 = pneg %p167
        %p318 = pneg %p196
        %p319 = pneg %p193
        %s320 = smul.u32 32, %s23
        %p321 = scmp.lt.s32.totalorder %s320, 63
        %s322 = scalar_select %p321, %s320, 63
        %s323 = smul.addr %s322, 8
        %s324 = scalar_lea.vmem %s7, %s323
        %s325 = smul.u32 32, %s23
        %s326 = smul.u32 32, %s23
        %p327 = scmp.lt.s32.totalorder %s326, 63
        %s328 = scalar_select %p327, %s326, 63
        %s329 = smul.addr %s328, 8
        %s330 = scalar_lea.vmem %s7, %s329
        %s331 = smul.u32 32, %s23
        %v332 = vld [vmem:[%s286] sm:$0xff]
        %v333 = vld [vmem:[%s286 + $0x8] sm:$0xff]
        %v334 = vld [vmem:[%s286 + $0x10] sm:$0xff]
        %v335 = vld [vmem:[%s286 + $0x18] sm:$0xff]
        %v336 = vld [vmem:[%s286 + $0x20] sm:$0xff]
        %v337 = vld [vmem:[%s286 + $0x28] sm:$0xff]
        %v338 = vld [vmem:[%s286 + $0x30] sm:$0xff]
        %v339 = vld [vmem:[%s286 + $0x38] sm:$0xff]
        %v340 = vld [vmem:[%s286 + $0x40] sm:$0xff]
        %v341 = vld [vmem:[%s286 + $0x48] sm:$0xff]
        %v342 = vld [vmem:[%s286 + $0x50] sm:$0xff]
        %v343 = vld [vmem:[%s286 + $0x58] sm:$0xff]
        %v344 = vld [vmem:[%s286 + $0x60] sm:$0xff]
        %v345 = vld [vmem:[%s286 + $0x68] sm:$0xff]
        %v346 = vld [vmem:[%s286 + $0x70] sm:$0xff]
        %v347 = vld [vmem:[%s286 + $0x78] sm:$0xff]
        %v348 = vld [vmem:[%s286 + $0x80] sm:$0xff]
        %v349 = vld [vmem:[%s286 + $0x88] sm:$0xff]
        %v350 = vld [vmem:[%s286 + $0x90] sm:$0xff]
        %v351 = vld [vmem:[%s286 + $0x98] sm:$0xff]
        %v352 = vld [vmem:[%s286 + $0xa0] sm:$0xff]
        %v353 = vld [vmem:[%s286 + $0xa8] sm:$0xff]
        %v354 = vld [vmem:[%s286 + $0xb0] sm:$0xff]
        %v355 = vld [vmem:[%s286 + $0xb8] sm:$0xff]
        %v356 = vld [vmem:[%s286 + $0xc0] sm:$0xff]
        %v357 = vld [vmem:[%s286 + $0xc8] sm:$0xff]
        %v358 = vld [vmem:[%s286 + $0xd0] sm:$0xff]
        %v359 = vld [vmem:[%s286 + $0xd8] sm:$0xff]
        %v360 = vld [vmem:[%s286 + $0xe0] sm:$0xff]
        %v361 = vld [vmem:[%s286 + $0xe8] sm:$0xff]
        %v362 = vld [vmem:[%s286 + $0xf0] sm:$0xff]
        %v363 = vld [vmem:[%s286 + $0xf8] sm:$0xff]
        %v364 = vld [vmem:[%s286 + $0x100] sm:$0xff]
        %v365 = vld [vmem:[%s286 + $0x108] sm:$0xff]
        %v366 = vld [vmem:[%s286 + $0x110] sm:$0xff]
        %v367 = vld [vmem:[%s286 + $0x118] sm:$0xff]
        %v368 = vld [vmem:[%s286 + $0x120] sm:$0xff]
        %v369 = vld [vmem:[%s286 + $0x128] sm:$0xff]
        %v370 = vld [vmem:[%s286 + $0x130] sm:$0xff]
        %v371 = vld [vmem:[%s286 + $0x138] sm:$0xff]
        %v372 = vld [vmem:[%s286 + $0x140] sm:$0xff]
        %v373 = vld [vmem:[%s286 + $0x148] sm:$0xff]
        %v374 = vld [vmem:[%s286 + $0x150] sm:$0xff]
        %v375 = vld [vmem:[%s286 + $0x158] sm:$0xff]
        %v376 = vld [vmem:[%s286 + $0x160] sm:$0xff]
        %v377 = vld [vmem:[%s286 + $0x168] sm:$0xff]
        %v378 = vld [vmem:[%s286 + $0x170] sm:$0xff]
        %v379 = vld [vmem:[%s286 + $0x178] sm:$0xff]
        %v380 = vld [vmem:[%s286 + $0x180] sm:$0xff]
        %v381 = vld [vmem:[%s286 + $0x188] sm:$0xff]
        %v382 = vld [vmem:[%s286 + $0x190] sm:$0xff]
        %v383 = vld [vmem:[%s286 + $0x198] sm:$0xff]
        %v384 = vld [vmem:[%s286 + $0x1a0] sm:$0xff]
        %v385 = vld [vmem:[%s286 + $0x1a8] sm:$0xff]
        %v386 = vld [vmem:[%s286 + $0x1b0] sm:$0xff]
        %v387 = vld [vmem:[%s286 + $0x1b8] sm:$0xff]
        %v388 = vld [vmem:[%s286 + $0x1c0] sm:$0xff]
        %v389 = vld [vmem:[%s286 + $0x1c8] sm:$0xff]
        %v390 = vld [vmem:[%s286 + $0x1d0] sm:$0xff]
        %v391 = vld [vmem:[%s286 + $0x1d8] sm:$0xff]
        %v392 = vld [vmem:[%s286 + $0x1e0] sm:$0xff]
        %v393 = vld [vmem:[%s286 + $0x1e8] sm:$0xff]
        %v394 = vld [vmem:[%s286 + $0x1f0] sm:$0xff]
        %v395 = vld [vmem:[%s286 + $0x1f8] sm:$0xff]
        %v396 = vpack.c.bf16 %v334, %v332
        %v397 = vpack.c.bf16 %v335, %v333
        %v398 = vpack.c.bf16 %v338, %v336
        %v399 = vpack.c.bf16 %v339, %v337
        %v400 = vpack.c.bf16 %v342, %v340
        %v401 = vpack.c.bf16 %v343, %v341
        %v402 = vpack.c.bf16 %v346, %v344
        %v403 = vpack.c.bf16 %v347, %v345
        %v404 = vpack.c.bf16 %v350, %v348
        %v405 = vpack.c.bf16 %v351, %v349
        %v406 = vpack.c.bf16 %v354, %v352
        %v407 = vpack.c.bf16 %v355, %v353
        %v408 = vpack.c.bf16 %v358, %v356
        %v409 = vpack.c.bf16 %v359, %v357
        %v410 = vpack.c.bf16 %v362, %v360
        %v411 = vpack.c.bf16 %v363, %v361
        %v412 = vpack.c.bf16 %v366, %v364
        %v413 = vpack.c.bf16 %v367, %v365
        %v414 = vpack.c.bf16 %v370, %v368
        %v415 = vpack.c.bf16 %v371, %v369
        %v416 = vpack.c.bf16 %v374, %v372
        %v417 = vpack.c.bf16 %v375, %v373
        %v418 = vpack.c.bf16 %v378, %v376
        %v419 = vpack.c.bf16 %v379, %v377
        %v420 = vpack.c.bf16 %v382, %v380
        %v421 = vpack.c.bf16 %v383, %v381
        %v422 = vpack.c.bf16 %v386, %v384
        %v423 = vpack.c.bf16 %v387, %v385
        %v424 = vpack.c.bf16 %v390, %v388
        %v425 = vpack.c.bf16 %v391, %v389
        %v426 = vpack.c.bf16 %v394, %v392
        %v427 = vpack.c.bf16 %v395, %v393
        %v428 = vld [vmem:[#allocation5] sm:$0xff]
        %v429 = vld [vmem:[#allocation5 + $0x8] sm:$0xff]
        %v430 = vld [vmem:[#allocation5 + $0x10] sm:$0xff]
        %v431 = vld [vmem:[#allocation5 + $0x18] sm:$0xff]
        %v432 = vld [vmem:[#allocation5 + $0x20] sm:$0xff]
        %v433 = vld [vmem:[#allocation5 + $0x28] sm:$0xff]
        %v434 = vld [vmem:[#allocation5 + $0x30] sm:$0xff]
        %v435 = vld [vmem:[#allocation5 + $0x38] sm:$0xff]
        %v436 = vld [vmem:[#allocation5 + $0x40] sm:$0xff]
        %v437 = vld [vmem:[#allocation5 + $0x48] sm:$0xff]
        %v438 = vld [vmem:[#allocation5 + $0x50] sm:$0xff]
        %v439 = vld [vmem:[#allocation5 + $0x58] sm:$0xff]
        %v440 = vld [vmem:[#allocation5 + $0x60] sm:$0xff]
        %v441 = vld [vmem:[#allocation5 + $0x68] sm:$0xff]
        %v442 = vld [vmem:[#allocation5 + $0x70] sm:$0xff]
        %v443 = vld [vmem:[#allocation5 + $0x78] sm:$0xff]
        %v444 = vld [vmem:[#allocation5 + $0x80] sm:$0xff]
        %v445 = vld [vmem:[#allocation5 + $0x88] sm:$0xff]
        %v446 = vld [vmem:[#allocation5 + $0x90] sm:$0xff]
        %v447 = vld [vmem:[#allocation5 + $0x98] sm:$0xff]
        %v448 = vld [vmem:[#allocation5 + $0xa0] sm:$0xff]
        %v449 = vld [vmem:[#allocation5 + $0xa8] sm:$0xff]
        %v450 = vld [vmem:[#allocation5 + $0xb0] sm:$0xff]
        %v451 = vld [vmem:[#allocation5 + $0xb8] sm:$0xff]
        %v452 = vld [vmem:[#allocation5 + $0xc0] sm:$0xff]
        %v453 = vld [vmem:[#allocation5 + $0xc8] sm:$0xff]
        %v454 = vld [vmem:[#allocation5 + $0xd0] sm:$0xff]
        %v455 = vld [vmem:[#allocation5 + $0xd8] sm:$0xff]
        %v456 = vld [vmem:[#allocation5 + $0xe0] sm:$0xff]
        %v457 = vld [vmem:[#allocation5 + $0xe8] sm:$0xff]
        %v458 = vld [vmem:[#allocation5 + $0xf0] sm:$0xff]
        %v459 = vld [vmem:[#allocation5 + $0xf8] sm:$0xff]
        %v460 = vld [vmem:[%s2] sm:$0x3]
        %v462 = vlaneseq
        %v463 = vshrl.u32 %v462, 7
        %v464 = vsub.s32 0, %v463
        %v465 = vrot.slane %v460, %v464
        %v466 = vlaneseq
        %v467 = vshrl.u32 %v466, 7
        %v468 = vsub.s32 1, %v467
        %v469 = vrot.slane %v460, %v468
        %v504 = vunpack.c.l.b16 %v428
        %v505 = vunpack.c.h.b16 %v428
        %v506 = vunpack.c.l.b16 %v429
        %v507 = vunpack.c.h.b16 %v429
        %v508 = vunpack.c.l.b16 %v430
        %v509 = vunpack.c.h.b16 %v430
        %v510 = vunpack.c.l.b16 %v431
        %v511 = vunpack.c.h.b16 %v431
        %v512 = vunpack.c.l.b16 %v432
        %v513 = vunpack.c.h.b16 %v432
        %v514 = vunpack.c.l.b16 %v433
        %v515 = vunpack.c.h.b16 %v433
        %v516 = vunpack.c.l.b16 %v434
        %v517 = vunpack.c.h.b16 %v434
        %v518 = vunpack.c.l.b16 %v435
        %v519 = vunpack.c.h.b16 %v435
        %v520 = vunpack.c.l.b16 %v436
        %v521 = vunpack.c.h.b16 %v436
        %v522 = vunpack.c.l.b16 %v437
        %v523 = vunpack.c.h.b16 %v437
        %v524 = vunpack.c.l.b16 %v438
        %v525 = vunpack.c.h.b16 %v438
        %v526 = vunpack.c.l.b16 %v439
        %v527 = vunpack.c.h.b16 %v439
        %v528 = vunpack.c.l.b16 %v440
        %v529 = vunpack.c.h.b16 %v440
        %v530 = vunpack.c.l.b16 %v441
        %v531 = vunpack.c.h.b16 %v441
        %v532 = vunpack.c.l.b16 %v442
        %v533 = vunpack.c.h.b16 %v442
        %v534 = vunpack.c.l.b16 %v443
        %v535 = vunpack.c.h.b16 %v443
        %v536 = vunpack.c.l.b16 %v444
        %v537 = vunpack.c.h.b16 %v444
        %v538 = vunpack.c.l.b16 %v445
        %v539 = vunpack.c.h.b16 %v445
        %v540 = vunpack.c.l.b16 %v446
        %v541 = vunpack.c.h.b16 %v446
        %v542 = vunpack.c.l.b16 %v447
        %v543 = vunpack.c.h.b16 %v447
        %v544 = vunpack.c.l.b16 %v448
        %v545 = vunpack.c.h.b16 %v448
        %v546 = vunpack.c.l.b16 %v449
        %v547 = vunpack.c.h.b16 %v449
        %v548 = vunpack.c.l.b16 %v450
        %v549 = vunpack.c.h.b16 %v450
        %v550 = vunpack.c.l.b16 %v451
        %v551 = vunpack.c.h.b16 %v451
        %v552 = vunpack.c.l.b16 %v452
        %v553 = vunpack.c.h.b16 %v452
        %v554 = vunpack.c.l.b16 %v453
        %v555 = vunpack.c.h.b16 %v453
        %v556 = vunpack.c.l.b16 %v454
        %v557 = vunpack.c.h.b16 %v454
        %v558 = vunpack.c.l.b16 %v455
        %v559 = vunpack.c.h.b16 %v455
        %v560 = vunpack.c.l.b16 %v456
        %v561 = vunpack.c.h.b16 %v456
        %v562 = vunpack.c.l.b16 %v457
        %v563 = vunpack.c.h.b16 %v457
        %v564 = vunpack.c.l.b16 %v458
        %v565 = vunpack.c.h.b16 %v458
        %v566 = vunpack.c.l.b16 %v459
        %v567 = vunpack.c.h.b16 %v459
        %v568 = vpack.c.b16 %v506, %v504
        %v569 = vpack.c.b16 %v507, %v505
        %v570 = vpack.c.b16 %v510, %v508
        %v571 = vpack.c.b16 %v511, %v509
        %v572 = vpack.c.b16 %v514, %v512
        %v573 = vpack.c.b16 %v515, %v513
        %v574 = vpack.c.b16 %v518, %v516
        %v575 = vpack.c.b16 %v519, %v517
        %v576 = vpack.c.b16 %v522, %v520
        %v577 = vpack.c.b16 %v523, %v521
        %v578 = vpack.c.b16 %v526, %v524
        %v579 = vpack.c.b16 %v527, %v525
        %v580 = vpack.c.b16 %v530, %v528
        %v581 = vpack.c.b16 %v531, %v529
        %v582 = vpack.c.b16 %v534, %v532
        %v583 = vpack.c.b16 %v535, %v533
        %v584 = vpack.c.b16 %v538, %v536
        %v585 = vpack.c.b16 %v539, %v537
        %v586 = vpack.c.b16 %v542, %v540
        %v587 = vpack.c.b16 %v543, %v541
        %v588 = vpack.c.b16 %v546, %v544
        %v589 = vpack.c.b16 %v547, %v545
        %v590 = vpack.c.b16 %v550, %v548
        %v591 = vpack.c.b16 %v551, %v549
        %v592 = vpack.c.b16 %v554, %v552
        %v593 = vpack.c.b16 %v555, %v553
        %v594 = vpack.c.b16 %v558, %v556
        %v595 = vpack.c.b16 %v559, %v557
        %v596 = vpack.c.b16 %v562, %v560
        %v597 = vpack.c.b16 %v563, %v561
        %v598 = vpack.c.b16 %v566, %v564
        %v599 = vpack.c.b16 %v567, %v565
        %632 = vmatprep.subr.bf16.mxu0 %v583
        %633 = vmatpush1.bf16.msra.mxu0 %v582
        %634 = vmatprep.subr.bf16.mxu0 %v581
        %635 = vmatpush1.bf16.msra.mxu0 %v580
        %636 = vmatprep.subr.bf16.mxu0 %v579
        %637 = vmatpush1.bf16.msra.mxu0 %v578
        %638 = vmatprep.subr.bf16.mxu0 %v577
        %639 = vmatpush1.bf16.msra.mxu0 %v576
        %640 = vmatprep.subr.bf16.mxu0 %v575
        %641 = vmatpush1.bf16.msra.mxu0 %v574
        %642 = vmatprep.subr.bf16.mxu0 %v573
        %643 = vmatpush1.bf16.msra.mxu0 %v572
        %644 = vmatprep.subr.bf16.mxu0 %v571
        %645 = vmatpush1.bf16.msra.mxu0 %v570
        %646 = vmatprep.subr.bf16.mxu0 %v569
        %647 = vmatpush1.bf16.msra.mxu0 %v568
        %648 = vmatprep.subr.bf16.mxu0 %v599
        %649 = vmatpush2.bf16.msra.mxu0 %v598
        %650 = vmatprep.subr.bf16.mxu0 %v597
        %651 = vmatpush2.bf16.msra.mxu0 %v596
        %652 = vmatprep.subr.bf16.mxu0 %v595
        %653 = vmatpush2.bf16.msra.mxu0 %v594
        %654 = vmatprep.subr.bf16.mxu0 %v593
        %655 = vmatpush2.bf16.msra.mxu0 %v592
        %656 = vmatprep.subr.bf16.mxu0 %v591
        %657 = vmatpush2.bf16.msra.mxu0 %v590
        %658 = vmatprep.subr.bf16.mxu0 %v589
        %659 = vmatpush2.bf16.msra.mxu0 %v588
        %660 = vmatprep.subr.bf16.mxu0 %v587
        %661 = vmatpush2.bf16.msra.mxu0 %v586
        %662 = vmatprep.subr.bf16.mxu0 %v585
        %663 = vmatpush2.bf16.msra.mxu0 %v584
        %664 = vmatprep.mubr.bf16.mxu0 %v397
        %665 = vmatmul.mubr.bf16.gmra.mxu0 %v396
        %v666 = vpop.f32.mrf.mxu0
        %v667 = vadd.f32 %v465, %v666
        %v668 = vpop.f32.mrf.mxu0
        %v669 = vadd.f32 %v469, %v668
        %v670 = vpop.f32.mrf.mxu0
        %v671 = vadd.f32 %v465, %v670
        %v672 = vpop.f32.mrf.mxu0
        %v673 = vadd.f32 %v469, %v672
        %674 = vmatprep.mubr.bf16.mxu0 %v399
        %675 = vmatmul.mubr.bf16.gmra.mxu0 %v398
        %v676 = vpop.f32.mrf.mxu0
        %v677 = vadd.f32 %v465, %v676
        %v678 = vpop.f32.mrf.mxu0
        %v679 = vadd.f32 %v469, %v678
        %v680 = vpop.f32.mrf.mxu0
        %v681 = vadd.f32 %v465, %v680
        %v682 = vpop.f32.mrf.mxu0
        %v683 = vadd.f32 %v469, %v682
        %684 = vmatprep.mubr.bf16.mxu0 %v401
        %685 = vmatmul.mubr.bf16.gmra.mxu0 %v400
        %v686 = vpop.f32.mrf.mxu0
        %v687 = vadd.f32 %v465, %v686
        %v688 = vpop.f32.mrf.mxu0
        %v689 = vadd.f32 %v469, %v688
        %v690 = vpop.f32.mrf.mxu0
        %v691 = vadd.f32 %v465, %v690
        %v692 = vpop.f32.mrf.mxu0
        %v693 = vadd.f32 %v469, %v692
        %694 = vmatprep.mubr.bf16.mxu0 %v403
        %695 = vmatmul.mubr.bf16.gmra.mxu0 %v402
        %v696 = vpop.f32.mrf.mxu0
        %v697 = vadd.f32 %v465, %v696
        %v698 = vpop.f32.mrf.mxu0
        %v699 = vadd.f32 %v469, %v698
        %v700 = vpop.f32.mrf.mxu0
        %v701 = vadd.f32 %v465, %v700
        %v702 = vpop.f32.mrf.mxu0
        %v703 = vadd.f32 %v469, %v702
        %704 = vmatprep.mubr.bf16.mxu0 %v405
        %705 = vmatmul.mubr.bf16.gmra.mxu0 %v404
        %v706 = vpop.f32.mrf.mxu0
        %v707 = vadd.f32 %v465, %v706
        %v708 = vpop.f32.mrf.mxu0
        %v709 = vadd.f32 %v469, %v708
        %v710 = vpop.f32.mrf.mxu0
        %v711 = vadd.f32 %v465, %v710
        %v712 = vpop.f32.mrf.mxu0
        %v713 = vadd.f32 %v469, %v712
        %714 = vmatprep.mubr.bf16.mxu0 %v407
        %715 = vmatmul.mubr.bf16.gmra.mxu0 %v406
        %v716 = vpop.f32.mrf.mxu0
        %v717 = vadd.f32 %v465, %v716
        %v718 = vpop.f32.mrf.mxu0
        %v719 = vadd.f32 %v469, %v718
        %v720 = vpop.f32.mrf.mxu0
        %v721 = vadd.f32 %v465, %v720
        %v722 = vpop.f32.mrf.mxu0
        %v723 = vadd.f32 %v469, %v722
        %724 = vmatprep.mubr.bf16.mxu0 %v409
        %725 = vmatmul.mubr.bf16.gmra.mxu0 %v408
        %v726 = vpop.f32.mrf.mxu0
        %v727 = vadd.f32 %v465, %v726
        %v728 = vpop.f32.mrf.mxu0
        %v729 = vadd.f32 %v469, %v728
        %v730 = vpop.f32.mrf.mxu0
        %v731 = vadd.f32 %v465, %v730
        %v732 = vpop.f32.mrf.mxu0
        %v733 = vadd.f32 %v469, %v732
        %734 = vmatprep.mubr.bf16.mxu0 %v411
        %735 = vmatmul.mubr.bf16.gmra.mxu0 %v410
        %v736 = vpop.f32.mrf.mxu0
        %v737 = vadd.f32 %v465, %v736
        %v738 = vpop.f32.mrf.mxu0
        %v739 = vadd.f32 %v469, %v738
        %v740 = vpop.f32.mrf.mxu0
        %v741 = vadd.f32 %v465, %v740
        %v742 = vpop.f32.mrf.mxu0
        %v743 = vadd.f32 %v469, %v742
        %744 = vmatprep.mubr.bf16.mxu0 %v413
        %745 = vmatmul.mubr.bf16.gmra.mxu0 %v412
        %v746 = vpop.f32.mrf.mxu0
        %v747 = vadd.f32 %v465, %v746
        %v748 = vpop.f32.mrf.mxu0
        %v749 = vadd.f32 %v469, %v748
        %v750 = vpop.f32.mrf.mxu0
        %v751 = vadd.f32 %v465, %v750
        %v752 = vpop.f32.mrf.mxu0
        %v753 = vadd.f32 %v469, %v752
        %754 = vmatprep.mubr.bf16.mxu0 %v415
        %755 = vmatmul.mubr.bf16.gmra.mxu0 %v414
        %v756 = vpop.f32.mrf.mxu0
        %v757 = vadd.f32 %v465, %v756
        %v758 = vpop.f32.mrf.mxu0
        %v759 = vadd.f32 %v469, %v758
        %v760 = vpop.f32.mrf.mxu0
        %v761 = vadd.f32 %v465, %v760
        %v762 = vpop.f32.mrf.mxu0
        %v763 = vadd.f32 %v469, %v762
        %764 = vmatprep.mubr.bf16.mxu0 %v417
        %765 = vmatmul.mubr.bf16.gmra.mxu0 %v416
        %v766 = vpop.f32.mrf.mxu0
        %v767 = vadd.f32 %v465, %v766
        %v768 = vpop.f32.mrf.mxu0
        %v769 = vadd.f32 %v469, %v768
        %v770 = vpop.f32.mrf.mxu0
        %v771 = vadd.f32 %v465, %v770
        %v772 = vpop.f32.mrf.mxu0
        %v773 = vadd.f32 %v469, %v772
        %774 = vmatprep.mubr.bf16.mxu0 %v419
        %775 = vmatmul.mubr.bf16.gmra.mxu0 %v418
        %v776 = vpop.f32.mrf.mxu0
        %v777 = vadd.f32 %v465, %v776
        %v778 = vpop.f32.mrf.mxu0
        %v779 = vadd.f32 %v469, %v778
        %v780 = vpop.f32.mrf.mxu0
        %v781 = vadd.f32 %v465, %v780
        %v782 = vpop.f32.mrf.mxu0
        %v783 = vadd.f32 %v469, %v782
        %784 = vmatprep.mubr.bf16.mxu0 %v421
        %785 = vmatmul.mubr.bf16.gmra.mxu0 %v420
        %v786 = vpop.f32.mrf.mxu0
        %v787 = vadd.f32 %v465, %v786
        %v788 = vpop.f32.mrf.mxu0
        %v789 = vadd.f32 %v469, %v788
        %v790 = vpop.f32.mrf.mxu0
        %v791 = vadd.f32 %v465, %v790
        %v792 = vpop.f32.mrf.mxu0
        %v793 = vadd.f32 %v469, %v792
        %794 = vmatprep.mubr.bf16.mxu0 %v423
        %795 = vmatmul.mubr.bf16.gmra.mxu0 %v422
        %v796 = vpop.f32.mrf.mxu0
        %v797 = vadd.f32 %v465, %v796
        %v798 = vpop.f32.mrf.mxu0
        %v799 = vadd.f32 %v469, %v798
        %v800 = vpop.f32.mrf.mxu0
        %v801 = vadd.f32 %v465, %v800
        %v802 = vpop.f32.mrf.mxu0
        %v803 = vadd.f32 %v469, %v802
        %804 = vmatprep.mubr.bf16.mxu0 %v425
        %805 = vmatmul.mubr.bf16.gmra.mxu0 %v424
        %v806 = vpop.f32.mrf.mxu0
        %v807 = vadd.f32 %v465, %v806
        %v808 = vpop.f32.mrf.mxu0
        %v809 = vadd.f32 %v469, %v808
        %v810 = vpop.f32.mrf.mxu0
        %v811 = vadd.f32 %v465, %v810
        %v812 = vpop.f32.mrf.mxu0
        %v813 = vadd.f32 %v469, %v812
        %814 = vmatprep.mubr.bf16.mxu0 %v427
        %815 = vmatmul.mubr.bf16.gmra.mxu0 %v426
        %v816 = vpop.f32.mrf.mxu0
        %v817 = vadd.f32 %v465, %v816
        %v818 = vpop.f32.mrf.mxu0
        %v819 = vadd.f32 %v469, %v818
        %v820 = vpop.f32.mrf.mxu0
        %v821 = vadd.f32 %v465, %v820
        %v822 = vpop.f32.mrf.mxu0
        %v823 = vadd.f32 %v469, %v822
        %824 = vdwg.mxu0
        %v825 = vadd.f32 %v667, %v332
        %v826 = vadd.f32 %v669, %v333
        %v827 = vadd.f32 %v671, %v334
        %v828 = vadd.f32 %v673, %v335
        %v829 = vadd.f32 %v677, %v336
        %v830 = vadd.f32 %v679, %v337
        %v831 = vadd.f32 %v681, %v338
        %v832 = vadd.f32 %v683, %v339
        %v833 = vadd.f32 %v687, %v340
        %v834 = vadd.f32 %v689, %v341
        %v835 = vadd.f32 %v691, %v342
        %v836 = vadd.f32 %v693, %v343
        %v837 = vadd.f32 %v697, %v344
        %v838 = vadd.f32 %v699, %v345
        %v839 = vadd.f32 %v701, %v346
        %v840 = vadd.f32 %v703, %v347
        %v841 = vadd.f32 %v707, %v348
        %v842 = vadd.f32 %v709, %v349
        %v843 = vadd.f32 %v711, %v350
        %v844 = vadd.f32 %v713, %v351
        %v845 = vadd.f32 %v717, %v352
        %v846 = vadd.f32 %v719, %v353
        %v847 = vadd.f32 %v721, %v354
        %v848 = vadd.f32 %v723, %v355
        %v849 = vadd.f32 %v727, %v356
        %v850 = vadd.f32 %v729, %v357
        %v851 = vadd.f32 %v731, %v358
        %v852 = vadd.f32 %v733, %v359
        %v853 = vadd.f32 %v737, %v360
        %v854 = vadd.f32 %v739, %v361
        %v855 = vadd.f32 %v741, %v362
        %v856 = vadd.f32 %v743, %v363
        %v857 = vadd.f32 %v747, %v364
        %v858 = vadd.f32 %v749, %v365
        %v859 = vadd.f32 %v751, %v366
        %v860 = vadd.f32 %v753, %v367
        %v861 = vadd.f32 %v757, %v368
        %v862 = vadd.f32 %v759, %v369
        %v863 = vadd.f32 %v761, %v370
        %v864 = vadd.f32 %v763, %v371
        %v865 = vadd.f32 %v767, %v372
        %v866 = vadd.f32 %v769, %v373
        %v867 = vadd.f32 %v771, %v374
        %v868 = vadd.f32 %v773, %v375
        %v869 = vadd.f32 %v777, %v376
        %v870 = vadd.f32 %v779, %v377
        %v871 = vadd.f32 %v781, %v378
        %v872 = vadd.f32 %v783, %v379
        %v873 = vadd.f32 %v787, %v380
        %v874 = vadd.f32 %v789, %v381
        %v875 = vadd.f32 %v791, %v382
        %v876 = vadd.f32 %v793, %v383
        %v877 = vadd.f32 %v797, %v384
        %v878 = vadd.f32 %v799, %v385
        %v879 = vadd.f32 %v801, %v386
        %v880 = vadd.f32 %v803, %v387
        %v881 = vadd.f32 %v807, %v388
        %v882 = vadd.f32 %v809, %v389
        %v883 = vadd.f32 %v811, %v390
        %v884 = vadd.f32 %v813, %v391
        %v885 = vadd.f32 %v817, %v392
        %v886 = vadd.f32 %v819, %v393
        %v887 = vadd.f32 %v821, %v394
        %v888 = vadd.f32 %v823, %v395
        %v889 = vpack.c.bf16 %v827, %v825
        %v890 = vpack.c.bf16 %v828, %v826
        %v891 = vpack.c.bf16 %v831, %v829
        %v892 = vpack.c.bf16 %v832, %v830
        %v893 = vpack.c.bf16 %v835, %v833
        %v894 = vpack.c.bf16 %v836, %v834
        %v895 = vpack.c.bf16 %v839, %v837
        %v896 = vpack.c.bf16 %v840, %v838
        %v897 = vpack.c.bf16 %v843, %v841
        %v898 = vpack.c.bf16 %v844, %v842
        %v899 = vpack.c.bf16 %v847, %v845
        %v900 = vpack.c.bf16 %v848, %v846
        %v901 = vpack.c.bf16 %v851, %v849
        %v902 = vpack.c.bf16 %v852, %v850
        %v903 = vpack.c.bf16 %v855, %v853
        %v904 = vpack.c.bf16 %v856, %v854
        %v905 = vpack.c.bf16 %v859, %v857
        %v906 = vpack.c.bf16 %v860, %v858
        %v907 = vpack.c.bf16 %v863, %v861
        %v908 = vpack.c.bf16 %v864, %v862
        %v909 = vpack.c.bf16 %v867, %v865
        %v910 = vpack.c.bf16 %v868, %v866
        %v911 = vpack.c.bf16 %v871, %v869
        %v912 = vpack.c.bf16 %v872, %v870
        %v913 = vpack.c.bf16 %v875, %v873
        %v914 = vpack.c.bf16 %v876, %v874
        %v915 = vpack.c.bf16 %v879, %v877
        %v916 = vpack.c.bf16 %v880, %v878
        %v917 = vpack.c.bf16 %v883, %v881
        %v918 = vpack.c.bf16 %v884, %v882
        %v919 = vpack.c.bf16 %v887, %v885
        %v920 = vpack.c.bf16 %v888, %v886
        %v921 = vld [vmem:[#allocation7] sm:$0xff]
        %v922 = vld [vmem:[#allocation7 + $0x8] sm:$0xff]
        %v923 = vld [vmem:[#allocation7 + $0x10] sm:$0xff]
        %v924 = vld [vmem:[#allocation7 + $0x18] sm:$0xff]
        %v925 = vld [vmem:[#allocation7 + $0x20] sm:$0xff]
        %v926 = vld [vmem:[#allocation7 + $0x28] sm:$0xff]
        %v927 = vld [vmem:[#allocation7 + $0x30] sm:$0xff]
        %v928 = vld [vmem:[#allocation7 + $0x38] sm:$0xff]
        %v929 = vld [vmem:[#allocation7 + $0x40] sm:$0xff]
        %v930 = vld [vmem:[#allocation7 + $0x48] sm:$0xff]
        %v931 = vld [vmem:[#allocation7 + $0x50] sm:$0xff]
        %v932 = vld [vmem:[#allocation7 + $0x58] sm:$0xff]
        %v933 = vld [vmem:[#allocation7 + $0x60] sm:$0xff]
        %v934 = vld [vmem:[#allocation7 + $0x68] sm:$0xff]
        %v935 = vld [vmem:[#allocation7 + $0x70] sm:$0xff]
        %v936 = vld [vmem:[#allocation7 + $0x78] sm:$0xff]
        %v937 = vld [vmem:[#allocation7 + $0x80] sm:$0xff]
        %v938 = vld [vmem:[#allocation7 + $0x88] sm:$0xff]
        %v939 = vld [vmem:[#allocation7 + $0x90] sm:$0xff]
        %v940 = vld [vmem:[#allocation7 + $0x98] sm:$0xff]
        %v941 = vld [vmem:[#allocation7 + $0xa0] sm:$0xff]
        %v942 = vld [vmem:[#allocation7 + $0xa8] sm:$0xff]
        %v943 = vld [vmem:[#allocation7 + $0xb0] sm:$0xff]
        %v944 = vld [vmem:[#allocation7 + $0xb8] sm:$0xff]
        %v945 = vld [vmem:[#allocation7 + $0xc0] sm:$0xff]
        %v946 = vld [vmem:[#allocation7 + $0xc8] sm:$0xff]
        %v947 = vld [vmem:[#allocation7 + $0xd0] sm:$0xff]
        %v948 = vld [vmem:[#allocation7 + $0xd8] sm:$0xff]
        %v949 = vld [vmem:[#allocation7 + $0xe0] sm:$0xff]
        %v950 = vld [vmem:[#allocation7 + $0xe8] sm:$0xff]
        %v951 = vld [vmem:[#allocation7 + $0xf0] sm:$0xff]
        %v952 = vld [vmem:[#allocation7 + $0xf8] sm:$0xff]
        %v953 = vld [vmem:[%s4] sm:$0x3]
        %v955 = vlaneseq
        %v956 = vshrl.u32 %v955, 7
        %v957 = vsub.s32 0, %v956
        %v958 = vrot.slane %v953, %v957
        %v959 = vlaneseq
        %v960 = vshrl.u32 %v959, 7
        %v961 = vsub.s32 1, %v960
        %v962 = vrot.slane %v953, %v961
        %v997 = vunpack.c.l.b16 %v921
        %v998 = vunpack.c.h.b16 %v921
        %v999 = vunpack.c.l.b16 %v922
        %v1000 = vunpack.c.h.b16 %v922
        %v1001 = vunpack.c.l.b16 %v923
        %v1002 = vunpack.c.h.b16 %v923
        %v1003 = vunpack.c.l.b16 %v924
        %v1004 = vunpack.c.h.b16 %v924
        %v1005 = vunpack.c.l.b16 %v925
        %v1006 = vunpack.c.h.b16 %v925
        %v1007 = vunpack.c.l.b16 %v926
        %v1008 = vunpack.c.h.b16 %v926
        %v1009 = vunpack.c.l.b16 %v927
        %v1010 = vunpack.c.h.b16 %v927
        %v1011 = vunpack.c.l.b16 %v928
        %v1012 = vunpack.c.h.b16 %v928
        %v1013 = vunpack.c.l.b16 %v929
        %v1014 = vunpack.c.h.b16 %v929
        %v1015 = vunpack.c.l.b16 %v930
        %v1016 = vunpack.c.h.b16 %v930
        %v1017 = vunpack.c.l.b16 %v931
        %v1018 = vunpack.c.h.b16 %v931
        %v1019 = vunpack.c.l.b16 %v932
        %v1020 = vunpack.c.h.b16 %v932
        %v1021 = vunpack.c.l.b16 %v933
        %v1022 = vunpack.c.h.b16 %v933
        %v1023 = vunpack.c.l.b16 %v934
        %v1024 = vunpack.c.h.b16 %v934
        %v1025 = vunpack.c.l.b16 %v935
        %v1026 = vunpack.c.h.b16 %v935
        %v1027 = vunpack.c.l.b16 %v936
        %v1028 = vunpack.c.h.b16 %v936
        %v1029 = vunpack.c.l.b16 %v937
        %v1030 = vunpack.c.h.b16 %v937
        %v1031 = vunpack.c.l.b16 %v938
        %v1032 = vunpack.c.h.b16 %v938
        %v1033 = vunpack.c.l.b16 %v939
        %v1034 = vunpack.c.h.b16 %v939
        %v1035 = vunpack.c.l.b16 %v940
        %v1036 = vunpack.c.h.b16 %v940
        %v1037 = vunpack.c.l.b16 %v941
        %v1038 = vunpack.c.h.b16 %v941
        %v1039 = vunpack.c.l.b16 %v942
        %v1040 = vunpack.c.h.b16 %v942
        %v1041 = vunpack.c.l.b16 %v943
        %v1042 = vunpack.c.h.b16 %v943
        %v1043 = vunpack.c.l.b16 %v944
        %v1044 = vunpack.c.h.b16 %v944
        %v1045 = vunpack.c.l.b16 %v945
        %v1046 = vunpack.c.h.b16 %v945
        %v1047 = vunpack.c.l.b16 %v946
        %v1048 = vunpack.c.h.b16 %v946
        %v1049 = vunpack.c.l.b16 %v947
        %v1050 = vunpack.c.h.b16 %v947
        %v1051 = vunpack.c.l.b16 %v948
        %v1052 = vunpack.c.h.b16 %v948
        %v1053 = vunpack.c.l.b16 %v949
        %v1054 = vunpack.c.h.b16 %v949
        %v1055 = vunpack.c.l.b16 %v950
        %v1056 = vunpack.c.h.b16 %v950
        %v1057 = vunpack.c.l.b16 %v951
        %v1058 = vunpack.c.h.b16 %v951
        %v1059 = vunpack.c.l.b16 %v952
        %v1060 = vunpack.c.h.b16 %v952
        %v1061 = vpack.c.b16 %v999, %v997
        %v1062 = vpack.c.b16 %v1000, %v998
        %v1063 = vpack.c.b16 %v1003, %v1001
        %v1064 = vpack.c.b16 %v1004, %v1002
        %v1065 = vpack.c.b16 %v1007, %v1005
        %v1066 = vpack.c.b16 %v1008, %v1006
        %v1067 = vpack.c.b16 %v1011, %v1009
        %v1068 = vpack.c.b16 %v1012, %v1010
        %v1069 = vpack.c.b16 %v1015, %v1013
        %v1070 = vpack.c.b16 %v1016, %v1014
        %v1071 = vpack.c.b16 %v1019, %v1017
        %v1072 = vpack.c.b16 %v1020, %v1018
        %v1073 = vpack.c.b16 %v1023, %v1021
        %v1074 = vpack.c.b16 %v1024, %v1022
        %v1075 = vpack.c.b16 %v1027, %v1025
        %v1076 = vpack.c.b16 %v1028, %v1026
        %v1077 = vpack.c.b16 %v1031, %v1029
        %v1078 = vpack.c.b16 %v1032, %v1030
        %v1079 = vpack.c.b16 %v1035, %v1033
        %v1080 = vpack.c.b16 %v1036, %v1034
        %v1081 = vpack.c.b16 %v1039, %v1037
        %v1082 = vpack.c.b16 %v1040, %v1038
        %v1083 = vpack.c.b16 %v1043, %v1041
        %v1084 = vpack.c.b16 %v1044, %v1042
        %v1085 = vpack.c.b16 %v1047, %v1045
        %v1086 = vpack.c.b16 %v1048, %v1046
        %v1087 = vpack.c.b16 %v1051, %v1049
        %v1088 = vpack.c.b16 %v1052, %v1050
        %v1089 = vpack.c.b16 %v1055, %v1053
        %v1090 = vpack.c.b16 %v1056, %v1054
        %v1091 = vpack.c.b16 %v1059, %v1057
        %v1092 = vpack.c.b16 %v1060, %v1058
        %1125 = vmatprep.subr.bf16.mxu0 %v1076
        %1126 = vmatpush1.bf16.msra.mxu0 %v1075
        %1127 = vmatprep.subr.bf16.mxu0 %v1074
        %1128 = vmatpush1.bf16.msra.mxu0 %v1073
        %1129 = vmatprep.subr.bf16.mxu0 %v1072
        %1130 = vmatpush1.bf16.msra.mxu0 %v1071
        %1131 = vmatprep.subr.bf16.mxu0 %v1070
        %1132 = vmatpush1.bf16.msra.mxu0 %v1069
        %1133 = vmatprep.subr.bf16.mxu0 %v1068
        %1134 = vmatpush1.bf16.msra.mxu0 %v1067
        %1135 = vmatprep.subr.bf16.mxu0 %v1066
        %1136 = vmatpush1.bf16.msra.mxu0 %v1065
        %1137 = vmatprep.subr.bf16.mxu0 %v1064
        %1138 = vmatpush1.bf16.msra.mxu0 %v1063
        %1139 = vmatprep.subr.bf16.mxu0 %v1062
        %1140 = vmatpush1.bf16.msra.mxu0 %v1061
        %1141 = vmatprep.subr.bf16.mxu0 %v1092
        %1142 = vmatpush2.bf16.msra.mxu0 %v1091
        %1143 = vmatprep.subr.bf16.mxu0 %v1090
        %1144 = vmatpush2.bf16.msra.mxu0 %v1089
        %1145 = vmatprep.subr.bf16.mxu0 %v1088
        %1146 = vmatpush2.bf16.msra.mxu0 %v1087
        %1147 = vmatprep.subr.bf16.mxu0 %v1086
        %1148 = vmatpush2.bf16.msra.mxu0 %v1085
        %1149 = vmatprep.subr.bf16.mxu0 %v1084
        %1150 = vmatpush2.bf16.msra.mxu0 %v1083
        %1151 = vmatprep.subr.bf16.mxu0 %v1082
        %1152 = vmatpush2.bf16.msra.mxu0 %v1081
        %1153 = vmatprep.subr.bf16.mxu0 %v1080
        %1154 = vmatpush2.bf16.msra.mxu0 %v1079
        %1155 = vmatprep.subr.bf16.mxu0 %v1078
        %1156 = vmatpush2.bf16.msra.mxu0 %v1077
        %1157 = vmatprep.mubr.bf16.mxu0 %v890
        %1158 = vmatmul.mubr.bf16.gmra.mxu0 %v889
        %v1159 = vpop.f32.mrf.mxu0
        %v1160 = vadd.f32 %v958, %v1159
        %v1161 = vpop.f32.mrf.mxu0
        %v1162 = vadd.f32 %v962, %v1161
        %v1163 = vpop.f32.mrf.mxu0
        %v1164 = vadd.f32 %v958, %v1163
        %v1165 = vpop.f32.mrf.mxu0
        %v1166 = vadd.f32 %v962, %v1165
        %1167 = vmatprep.mubr.bf16.mxu0 %v892
        %1168 = vmatmul.mubr.bf16.gmra.mxu0 %v891
        %v1169 = vpop.f32.mrf.mxu0
        %v1170 = vadd.f32 %v958, %v1169
        %v1171 = vpop.f32.mrf.mxu0
        %v1172 = vadd.f32 %v962, %v1171
        %v1173 = vpop.f32.mrf.mxu0
        %v1174 = vadd.f32 %v958, %v1173
        %v1175 = vpop.f32.mrf.mxu0
        %v1176 = vadd.f32 %v962, %v1175
        %1177 = vmatprep.mubr.bf16.mxu0 %v894
        %1178 = vmatmul.mubr.bf16.gmra.mxu0 %v893
        %v1179 = vpop.f32.mrf.mxu0
        %v1180 = vadd.f32 %v958, %v1179
        %v1181 = vpop.f32.mrf.mxu0
        %v1182 = vadd.f32 %v962, %v1181
        %v1183 = vpop.f32.mrf.mxu0
        %v1184 = vadd.f32 %v958, %v1183
        %v1185 = vpop.f32.mrf.mxu0
        %v1186 = vadd.f32 %v962, %v1185
        %1187 = vmatprep.mubr.bf16.mxu0 %v896
        %1188 = vmatmul.mubr.bf16.gmra.mxu0 %v895
        %v1189 = vpop.f32.mrf.mxu0
        %v1190 = vadd.f32 %v958, %v1189
        %v1191 = vpop.f32.mrf.mxu0
        %v1192 = vadd.f32 %v962, %v1191
        %v1193 = vpop.f32.mrf.mxu0
        %v1194 = vadd.f32 %v958, %v1193
        %v1195 = vpop.f32.mrf.mxu0
        %v1196 = vadd.f32 %v962, %v1195
        %1197 = vmatprep.mubr.bf16.mxu0 %v898
        %1198 = vmatmul.mubr.bf16.gmra.mxu0 %v897
        %v1199 = vpop.f32.mrf.mxu0
        %v1200 = vadd.f32 %v958, %v1199
        %v1201 = vpop.f32.mrf.mxu0
        %v1202 = vadd.f32 %v962, %v1201
        %v1203 = vpop.f32.mrf.mxu0
        %v1204 = vadd.f32 %v958, %v1203
        %v1205 = vpop.f32.mrf.mxu0
        %v1206 = vadd.f32 %v962, %v1205
        %1207 = vmatprep.mubr.bf16.mxu0 %v900
        %1208 = vmatmul.mubr.bf16.gmra.mxu0 %v899
        %v1209 = vpop.f32.mrf.mxu0
        %v1210 = vadd.f32 %v958, %v1209
        %v1211 = vpop.f32.mrf.mxu0
        %v1212 = vadd.f32 %v962, %v1211
        %v1213 = vpop.f32.mrf.mxu0
        %v1214 = vadd.f32 %v958, %v1213
        %v1215 = vpop.f32.mrf.mxu0
        %v1216 = vadd.f32 %v962, %v1215
        %1217 = vmatprep.mubr.bf16.mxu0 %v902
        %1218 = vmatmul.mubr.bf16.gmra.mxu0 %v901
        %v1219 = vpop.f32.mrf.mxu0
        %v1220 = vadd.f32 %v958, %v1219
        %v1221 = vpop.f32.mrf.mxu0
        %v1222 = vadd.f32 %v962, %v1221
        %v1223 = vpop.f32.mrf.mxu0
        %v1224 = vadd.f32 %v958, %v1223
        %v1225 = vpop.f32.mrf.mxu0
        %v1226 = vadd.f32 %v962, %v1225
        %1227 = vmatprep.mubr.bf16.mxu0 %v904
        %1228 = vmatmul.mubr.bf16.gmra.mxu0 %v903
        %v1229 = vpop.f32.mrf.mxu0
        %v1230 = vadd.f32 %v958, %v1229
        %v1231 = vpop.f32.mrf.mxu0
        %v1232 = vadd.f32 %v962, %v1231
        %v1233 = vpop.f32.mrf.mxu0
        %v1234 = vadd.f32 %v958, %v1233
        %v1235 = vpop.f32.mrf.mxu0
        %v1236 = vadd.f32 %v962, %v1235
        %1237 = vmatprep.mubr.bf16.mxu0 %v906
        %1238 = vmatmul.mubr.bf16.gmra.mxu0 %v905
        %v1239 = vpop.f32.mrf.mxu0
        %v1240 = vadd.f32 %v958, %v1239
        %v1241 = vpop.f32.mrf.mxu0
        %v1242 = vadd.f32 %v962, %v1241
        %v1243 = vpop.f32.mrf.mxu0
        %v1244 = vadd.f32 %v958, %v1243
        %v1245 = vpop.f32.mrf.mxu0
        %v1246 = vadd.f32 %v962, %v1245
        %1247 = vmatprep.mubr.bf16.mxu0 %v908
        %1248 = vmatmul.mubr.bf16.gmra.mxu0 %v907
        %v1249 = vpop.f32.mrf.mxu0
        %v1250 = vadd.f32 %v958, %v1249
        %v1251 = vpop.f32.mrf.mxu0
        %v1252 = vadd.f32 %v962, %v1251
        %v1253 = vpop.f32.mrf.mxu0
        %v1254 = vadd.f32 %v958, %v1253
        %v1255 = vpop.f32.mrf.mxu0
        %v1256 = vadd.f32 %v962, %v1255
        %1257 = vmatprep.mubr.bf16.mxu0 %v910
        %1258 = vmatmul.mubr.bf16.gmra.mxu0 %v909
        %v1259 = vpop.f32.mrf.mxu0
        %v1260 = vadd.f32 %v958, %v1259
        %v1261 = vpop.f32.mrf.mxu0
        %v1262 = vadd.f32 %v962, %v1261
        %v1263 = vpop.f32.mrf.mxu0
        %v1264 = vadd.f32 %v958, %v1263
        %v1265 = vpop.f32.mrf.mxu0
        %v1266 = vadd.f32 %v962, %v1265
        %1267 = vmatprep.mubr.bf16.mxu0 %v912
        %1268 = vmatmul.mubr.bf16.gmra.mxu0 %v911
        %v1269 = vpop.f32.mrf.mxu0
        %v1270 = vadd.f32 %v958, %v1269
        %v1271 = vpop.f32.mrf.mxu0
        %v1272 = vadd.f32 %v962, %v1271
        %v1273 = vpop.f32.mrf.mxu0
        %v1274 = vadd.f32 %v958, %v1273
        %v1275 = vpop.f32.mrf.mxu0
        %v1276 = vadd.f32 %v962, %v1275
        %1277 = vmatprep.mubr.bf16.mxu0 %v914
        %1278 = vmatmul.mubr.bf16.gmra.mxu0 %v913
        %v1279 = vpop.f32.mrf.mxu0
        %v1280 = vadd.f32 %v958, %v1279
        %v1281 = vpop.f32.mrf.mxu0
        %v1282 = vadd.f32 %v962, %v1281
        %v1283 = vpop.f32.mrf.mxu0
        %v1284 = vadd.f32 %v958, %v1283
        %v1285 = vpop.f32.mrf.mxu0
        %v1286 = vadd.f32 %v962, %v1285
        %1287 = vmatprep.mubr.bf16.mxu0 %v916
        %1288 = vmatmul.mubr.bf16.gmra.mxu0 %v915
        %v1289 = vpop.f32.mrf.mxu0
        %v1290 = vadd.f32 %v958, %v1289
        %v1291 = vpop.f32.mrf.mxu0
        %v1292 = vadd.f32 %v962, %v1291
        %v1293 = vpop.f32.mrf.mxu0
        %v1294 = vadd.f32 %v958, %v1293
        %v1295 = vpop.f32.mrf.mxu0
        %v1296 = vadd.f32 %v962, %v1295
        %1297 = vmatprep.mubr.bf16.mxu0 %v918
        %1298 = vmatmul.mubr.bf16.gmra.mxu0 %v917
        %v1299 = vpop.f32.mrf.mxu0
        %v1300 = vadd.f32 %v958, %v1299
        %v1301 = vpop.f32.mrf.mxu0
        %v1302 = vadd.f32 %v962, %v1301
        %v1303 = vpop.f32.mrf.mxu0
        %v1304 = vadd.f32 %v958, %v1303
        %v1305 = vpop.f32.mrf.mxu0
        %v1306 = vadd.f32 %v962, %v1305
        %1307 = vmatprep.mubr.bf16.mxu0 %v920
        %1308 = vmatmul.mubr.bf16.gmra.mxu0 %v919
        %v1309 = vpop.f32.mrf.mxu0
        %v1310 = vadd.f32 %v958, %v1309
        %v1311 = vpop.f32.mrf.mxu0
        %v1312 = vadd.f32 %v962, %v1311
        %v1313 = vpop.f32.mrf.mxu0
        %v1314 = vadd.f32 %v958, %v1313
        %v1315 = vpop.f32.mrf.mxu0
        %v1316 = vadd.f32 %v962, %v1315
        %1317 = vdwg.mxu0
        %v1318 = vadd.f32 %v1160, %v825
        %v1319 = vadd.f32 %v1162, %v826
        %v1320 = vadd.f32 %v1164, %v827
        %v1321 = vadd.f32 %v1166, %v828
        %v1322 = vadd.f32 %v1170, %v829
        %v1323 = vadd.f32 %v1172, %v830
        %v1324 = vadd.f32 %v1174, %v831
        %v1325 = vadd.f32 %v1176, %v832
        %v1326 = vadd.f32 %v1180, %v833
        %v1327 = vadd.f32 %v1182, %v834
        %v1328 = vadd.f32 %v1184, %v835
        %v1329 = vadd.f32 %v1186, %v836
        %v1330 = vadd.f32 %v1190, %v837
        %v1331 = vadd.f32 %v1192, %v838
        %v1332 = vadd.f32 %v1194, %v839
        %v1333 = vadd.f32 %v1196, %v840
        %v1334 = vadd.f32 %v1200, %v841
        %v1335 = vadd.f32 %v1202, %v842
        %v1336 = vadd.f32 %v1204, %v843
        %v1337 = vadd.f32 %v1206, %v844
        %v1338 = vadd.f32 %v1210, %v845
        %v1339 = vadd.f32 %v1212, %v846
        %v1340 = vadd.f32 %v1214, %v847
        %v1341 = vadd.f32 %v1216, %v848
        %v1342 = vadd.f32 %v1220, %v849
        %v1343 = vadd.f32 %v1222, %v850
        %v1344 = vadd.f32 %v1224, %v851
        %v1345 = vadd.f32 %v1226, %v852
        %v1346 = vadd.f32 %v1230, %v853
        %v1347 = vadd.f32 %v1232, %v854
        %v1348 = vadd.f32 %v1234, %v855
        %v1349 = vadd.f32 %v1236, %v856
        %v1350 = vadd.f32 %v1240, %v857
        %v1351 = vadd.f32 %v1242, %v858
        %v1352 = vadd.f32 %v1244, %v859
        %v1353 = vadd.f32 %v1246, %v860
        %v1354 = vadd.f32 %v1250, %v861
        %v1355 = vadd.f32 %v1252, %v862
        %v1356 = vadd.f32 %v1254, %v863
        %v1357 = vadd.f32 %v1256, %v864
        %v1358 = vadd.f32 %v1260, %v865
        %v1359 = vadd.f32 %v1262, %v866
        %v1360 = vadd.f32 %v1264, %v867
        %v1361 = vadd.f32 %v1266, %v868
        %v1362 = vadd.f32 %v1270, %v869
        %v1363 = vadd.f32 %v1272, %v870
        %v1364 = vadd.f32 %v1274, %v871
        %v1365 = vadd.f32 %v1276, %v872
        %v1366 = vadd.f32 %v1280, %v873
        %v1367 = vadd.f32 %v1282, %v874
        %v1368 = vadd.f32 %v1284, %v875
        %v1369 = vadd.f32 %v1286, %v876
        %v1370 = vadd.f32 %v1290, %v877
        %v1371 = vadd.f32 %v1292, %v878
        %v1372 = vadd.f32 %v1294, %v879
        %v1373 = vadd.f32 %v1296, %v880
        %v1374 = vadd.f32 %v1300, %v881
        %v1375 = vadd.f32 %v1302, %v882
        %v1376 = vadd.f32 %v1304, %v883
        %v1377 = vadd.f32 %v1306, %v884
        %v1378 = vadd.f32 %v1310, %v885
        %v1379 = vadd.f32 %v1312, %v886
        %v1380 = vadd.f32 %v1314, %v887
        %v1381 = vadd.f32 %v1316, %v888
        %v1382 = vld [vmem:[%s5] sm:$0x3]
        %v1384 = vlaneseq
        %v1385 = vshrl.u32 %v1384, 7
        %v1386 = vsub.s32 0, %v1385
        %v1387 = vrot.slane %v1382, %v1386
        %v1388 = vlaneseq
        %v1389 = vshrl.u32 %v1388, 7
        %v1390 = vsub.s32 1, %v1389
        %v1391 = vrot.slane %v1382, %v1390
        %v1394 = vmul.f32 %v1318, %v1387
        %v1395 = vmul.f32 %v1319, %v1391
        %v1396 = vmul.f32 %v1320, %v1387
        %v1397 = vmul.f32 %v1321, %v1391
        %v1398 = vmul.f32 %v1322, %v1387
        %v1399 = vmul.f32 %v1323, %v1391
        %v1400 = vmul.f32 %v1324, %v1387
        %v1401 = vmul.f32 %v1325, %v1391
        %v1402 = vmul.f32 %v1326, %v1387
        %v1403 = vmul.f32 %v1327, %v1391
        %v1404 = vmul.f32 %v1328, %v1387
        %v1405 = vmul.f32 %v1329, %v1391
        %v1406 = vmul.f32 %v1330, %v1387
        %v1407 = vmul.f32 %v1331, %v1391
        %v1408 = vmul.f32 %v1332, %v1387
        %v1409 = vmul.f32 %v1333, %v1391
        %v1410 = vmul.f32 %v1334, %v1387
        %v1411 = vmul.f32 %v1335, %v1391
        %v1412 = vmul.f32 %v1336, %v1387
        %v1413 = vmul.f32 %v1337, %v1391
        %v1414 = vmul.f32 %v1338, %v1387
        %v1415 = vmul.f32 %v1339, %v1391
        %v1416 = vmul.f32 %v1340, %v1387
        %v1417 = vmul.f32 %v1341, %v1391
        %v1418 = vmul.f32 %v1342, %v1387
        %v1419 = vmul.f32 %v1343, %v1391
        %v1420 = vmul.f32 %v1344, %v1387
        %v1421 = vmul.f32 %v1345, %v1391
        %v1422 = vmul.f32 %v1346, %v1387
        %v1423 = vmul.f32 %v1347, %v1391
        %v1424 = vmul.f32 %v1348, %v1387
        %v1425 = vmul.f32 %v1349, %v1391
        %v1426 = vmul.f32 %v1350, %v1387
        %v1427 = vmul.f32 %v1351, %v1391
        %v1428 = vmul.f32 %v1352, %v1387
        %v1429 = vmul.f32 %v1353, %v1391
        %v1430 = vmul.f32 %v1354, %v1387
        %v1431 = vmul.f32 %v1355, %v1391
        %v1432 = vmul.f32 %v1356, %v1387
        %v1433 = vmul.f32 %v1357, %v1391
        %v1434 = vmul.f32 %v1358, %v1387
        %v1435 = vmul.f32 %v1359, %v1391
        %v1436 = vmul.f32 %v1360, %v1387
        %v1437 = vmul.f32 %v1361, %v1391
        %v1438 = vmul.f32 %v1362, %v1387
        %v1439 = vmul.f32 %v1363, %v1391
        %v1440 = vmul.f32 %v1364, %v1387
        %v1441 = vmul.f32 %v1365, %v1391
        %v1442 = vmul.f32 %v1366, %v1387
        %v1443 = vmul.f32 %v1367, %v1391
        %v1444 = vmul.f32 %v1368, %v1387
        %v1445 = vmul.f32 %v1369, %v1391
        %v1446 = vmul.f32 %v1370, %v1387
        %v1447 = vmul.f32 %v1371, %v1391
        %v1448 = vmul.f32 %v1372, %v1387
        %v1449 = vmul.f32 %v1373, %v1391
        %v1450 = vmul.f32 %v1374, %v1387
        %v1451 = vmul.f32 %v1375, %v1391
        %v1452 = vmul.f32 %v1376, %v1387
        %v1453 = vmul.f32 %v1377, %v1391
        %v1454 = vmul.f32 %v1378, %v1387
        %v1455 = vmul.f32 %v1379, %v1391
        %v1456 = vmul.f32 %v1380, %v1387
        %v1457 = vmul.f32 %v1381, %v1391
        %v1458 = vadd.f32 %v1394, %v1395
        %1459 = vadd.xlane.f32.xlu0 %v1458
        %v1460 = vpop.xlane.xlu0 %1459
        %v1461 = vadd.f32 %v1396, %v1397
        %1462 = vadd.xlane.f32.xlu0 %v1461
        %v1463 = vpop.xlane.xlu0 %1462
        %v1464 = vadd.f32 %v1398, %v1399
        %1465 = vadd.xlane.f32.xlu0 %v1464
        %v1466 = vpop.xlane.xlu0 %1465
        %v1467 = vadd.f32 %v1400, %v1401
        %1468 = vadd.xlane.f32.xlu0 %v1467
        %v1469 = vpop.xlane.xlu0 %1468
        %v1470 = vadd.f32 %v1402, %v1403
        %1471 = vadd.xlane.f32.xlu0 %v1470
        %v1472 = vpop.xlane.xlu0 %1471
        %v1473 = vadd.f32 %v1404, %v1405
        %1474 = vadd.xlane.f32.xlu0 %v1473
        %v1475 = vpop.xlane.xlu0 %1474
        %v1476 = vadd.f32 %v1406, %v1407
        %1477 = vadd.xlane.f32.xlu0 %v1476
        %v1478 = vpop.xlane.xlu0 %1477
        %v1479 = vadd.f32 %v1408, %v1409
        %1480 = vadd.xlane.f32.xlu0 %v1479
        %v1481 = vpop.xlane.xlu0 %1480
        %v1482 = vadd.f32 %v1410, %v1411
        %1483 = vadd.xlane.f32.xlu0 %v1482
        %v1484 = vpop.xlane.xlu0 %1483
        %v1485 = vadd.f32 %v1412, %v1413
        %1486 = vadd.xlane.f32.xlu0 %v1485
        %v1487 = vpop.xlane.xlu0 %1486
        %v1488 = vadd.f32 %v1414, %v1415
        %1489 = vadd.xlane.f32.xlu0 %v1488
        %v1490 = vpop.xlane.xlu0 %1489
        %v1491 = vadd.f32 %v1416, %v1417
        %1492 = vadd.xlane.f32.xlu0 %v1491
        %v1493 = vpop.xlane.xlu0 %1492
        %v1494 = vadd.f32 %v1418, %v1419
        %1495 = vadd.xlane.f32.xlu0 %v1494
        %v1496 = vpop.xlane.xlu0 %1495
        %v1497 = vadd.f32 %v1420, %v1421
        %1498 = vadd.xlane.f32.xlu0 %v1497
        %v1499 = vpop.xlane.xlu0 %1498
        %v1500 = vadd.f32 %v1422, %v1423
        %1501 = vadd.xlane.f32.xlu0 %v1500
        %v1502 = vpop.xlane.xlu0 %1501
        %v1503 = vadd.f32 %v1424, %v1425
        %1504 = vadd.xlane.f32.xlu0 %v1503
        %v1505 = vpop.xlane.xlu0 %1504
        %v1506 = vadd.f32 %v1426, %v1427
        %1507 = vadd.xlane.f32.xlu0 %v1506
        %v1508 = vpop.xlane.xlu0 %1507
        %v1509 = vadd.f32 %v1428, %v1429
        %1510 = vadd.xlane.f32.xlu0 %v1509
        %v1511 = vpop.xlane.xlu0 %1510
        %v1512 = vadd.f32 %v1430, %v1431
        %1513 = vadd.xlane.f32.xlu0 %v1512
        %v1514 = vpop.xlane.xlu0 %1513
        %v1515 = vadd.f32 %v1432, %v1433
        %1516 = vadd.xlane.f32.xlu0 %v1515
        %v1517 = vpop.xlane.xlu0 %1516
        %v1518 = vadd.f32 %v1434, %v1435
        %1519 = vadd.xlane.f32.xlu0 %v1518
        %v1520 = vpop.xlane.xlu0 %1519
        %v1521 = vadd.f32 %v1436, %v1437
        %1522 = vadd.xlane.f32.xlu0 %v1521
        %v1523 = vpop.xlane.xlu0 %1522
        %v1524 = vadd.f32 %v1438, %v1439
        %1525 = vadd.xlane.f32.xlu0 %v1524
        %v1526 = vpop.xlane.xlu0 %1525
        %v1527 = vadd.f32 %v1440, %v1441
        %1528 = vadd.xlane.f32.xlu0 %v1527
        %v1529 = vpop.xlane.xlu0 %1528
        %v1530 = vadd.f32 %v1442, %v1443
        %1531 = vadd.xlane.f32.xlu0 %v1530
        %v1532 = vpop.xlane.xlu0 %1531
        %v1533 = vadd.f32 %v1444, %v1445
        %1534 = vadd.xlane.f32.xlu0 %v1533
        %v1535 = vpop.xlane.xlu0 %1534
        %v1536 = vadd.f32 %v1446, %v1447
        %1537 = vadd.xlane.f32.xlu0 %v1536
        %v1538 = vpop.xlane.xlu0 %1537
        %v1539 = vadd.f32 %v1448, %v1449
        %1540 = vadd.xlane.f32.xlu0 %v1539
        %v1541 = vpop.xlane.xlu0 %1540
        %v1542 = vadd.f32 %v1450, %v1451
        %1543 = vadd.xlane.f32.xlu0 %v1542
        %v1544 = vpop.xlane.xlu0 %1543
        %v1545 = vadd.f32 %v1452, %v1453
        %1546 = vadd.xlane.f32.xlu0 %v1545
        %v1547 = vpop.xlane.xlu0 %1546
        %v1548 = vadd.f32 %v1454, %v1455
        %1549 = vadd.xlane.f32.xlu0 %v1548
        %v1550 = vpop.xlane.xlu0 %1549
        %v1551 = vadd.f32 %v1456, %v1457
        %1552 = vadd.xlane.f32.xlu0 %v1551
        %v1553 = vpop.xlane.xlu0 %1552
        %s1554 = sld [smem:[#allocation2]]
        %v1555 = vstv %s1554
        %v1556 = vadd.f32 %v1460, %v1555
        %v1557 = vadd.f32 %v1463, %v1555
        %v1558 = vadd.f32 %v1466, %v1555
        %v1559 = vadd.f32 %v1469, %v1555
        %v1560 = vadd.f32 %v1472, %v1555
        %v1561 = vadd.f32 %v1475, %v1555
        %v1562 = vadd.f32 %v1478, %v1555
        %v1563 = vadd.f32 %v1481, %v1555
        %v1564 = vadd.f32 %v1484, %v1555
        %v1565 = vadd.f32 %v1487, %v1555
        %v1566 = vadd.f32 %v1490, %v1555
        %v1567 = vadd.f32 %v1493, %v1555
        %v1568 = vadd.f32 %v1496, %v1555
        %v1569 = vadd.f32 %v1499, %v1555
        %v1570 = vadd.f32 %v1502, %v1555
        %v1571 = vadd.f32 %v1505, %v1555
        %v1572 = vadd.f32 %v1508, %v1555
        %v1573 = vadd.f32 %v1511, %v1555
        %v1574 = vadd.f32 %v1514, %v1555
        %v1575 = vadd.f32 %v1517, %v1555
        %v1576 = vadd.f32 %v1520, %v1555
        %v1577 = vadd.f32 %v1523, %v1555
        %v1578 = vadd.f32 %v1526, %v1555
        %v1579 = vadd.f32 %v1529, %v1555
        %v1580 = vadd.f32 %v1532, %v1555
        %v1581 = vadd.f32 %v1535, %v1555
        %v1582 = vadd.f32 %v1538, %v1555
        %v1583 = vadd.f32 %v1541, %v1555
        %v1584 = vadd.f32 %v1544, %v1555
        %v1585 = vadd.f32 %v1547, %v1555
        %v1586 = vadd.f32 %v1550, %v1555
        %v1587 = vadd.f32 %v1553, %v1555
        %vm1588 = vcmask 7168
        %1589 = vst.msk [vmem:[%s330] sm:$0xff] %vm1588, %v1556
        %1590 = vst.msk [vmem:[%s330 + $0x8] sm:$0xff] %vm1588, %v1557
        %1591 = vst.msk [vmem:[%s330 + $0x10] sm:$0xff] %vm1588, %v1558
        %1592 = vst.msk [vmem:[%s330 + $0x18] sm:$0xff] %vm1588, %v1559
        %1593 = vst.msk [vmem:[%s330 + $0x20] sm:$0xff] %vm1588, %v1560
        %1594 = vst.msk [vmem:[%s330 + $0x28] sm:$0xff] %vm1588, %v1561
        %1595 = vst.msk [vmem:[%s330 + $0x30] sm:$0xff] %vm1588, %v1562
        %1596 = vst.msk [vmem:[%s330 + $0x38] sm:$0xff] %vm1588, %v1563
        %1597 = vst.msk [vmem:[%s330 + $0x40] sm:$0xff] %vm1588, %v1564
        %1598 = vst.msk [vmem:[%s330 + $0x48] sm:$0xff] %vm1588, %v1565
        %1599 = vst.msk [vmem:[%s330 + $0x50] sm:$0xff] %vm1588, %v1566
        %1600 = vst.msk [vmem:[%s330 + $0x58] sm:$0xff] %vm1588, %v1567
        %1601 = vst.msk [vmem:[%s330 + $0x60] sm:$0xff] %vm1588, %v1568
        %1602 = vst.msk [vmem:[%s330 + $0x68] sm:$0xff] %vm1588, %v1569
        %1603 = vst.msk [vmem:[%s330 + $0x70] sm:$0xff] %vm1588, %v1570
        %1604 = vst.msk [vmem:[%s330 + $0x78] sm:$0xff] %vm1588, %v1571
        %1605 = vst.msk [vmem:[%s330 + $0x80] sm:$0xff] %vm1588, %v1572
        %1606 = vst.msk [vmem:[%s330 + $0x88] sm:$0xff] %vm1588, %v1573
        %1607 = vst.msk [vmem:[%s330 + $0x90] sm:$0xff] %vm1588, %v1574
        %1608 = vst.msk [vmem:[%s330 + $0x98] sm:$0xff] %vm1588, %v1575
        %1609 = vst.msk [vmem:[%s330 + $0xa0] sm:$0xff] %vm1588, %v1576
        %1610 = vst.msk [vmem:[%s330 + $0xa8] sm:$0xff] %vm1588, %v1577
        %1611 = vst.msk [vmem:[%s330 + $0xb0] sm:$0xff] %vm1588, %v1578
        %1612 = vst.msk [vmem:[%s330 + $0xb8] sm:$0xff] %vm1588, %v1579
        %1613 = vst.msk [vmem:[%s330 + $0xc0] sm:$0xff] %vm1588, %v1580
        %1614 = vst.msk [vmem:[%s330 + $0xc8] sm:$0xff] %vm1588, %v1581
        %1615 = vst.msk [vmem:[%s330 + $0xd0] sm:$0xff] %vm1588, %v1582
        %1616 = vst.msk [vmem:[%s330 + $0xd8] sm:$0xff] %vm1588, %v1583
        %1617 = vst.msk [vmem:[%s330 + $0xe0] sm:$0xff] %vm1588, %v1584
        %1618 = vst.msk [vmem:[%s330 + $0xe8] sm:$0xff] %vm1588, %v1585
        %1619 = vst.msk [vmem:[%s330 + $0xf0] sm:$0xff] %vm1588, %v1586
        %1620 = vst.msk [vmem:[%s330 + $0xf8] sm:$0xff] %vm1588, %v1587
        %s1621 = smul.u32 32, %s23
        %p1622 = scmp.lt.s32.totalorder %s1621, 63
        %s1623 = scalar_select %p1622, %s1621, 63
        %s1624 = smul.addr %s1623, 8
        %s1625 = scalar_lea.vmem %s7, %s1624
        // Predicated region
        $region61: #{tpu_custom_call.1} parent=47 // pred_check
          %p1626 = pneg %p193
        $region62: #{tpu_custom_call.1} parent=47 // pred_check_branch
          %1628 = sbr.rel (%p1626) target = $region64
        $region63: #{tpu_custom_call.1} parent=47 // pred_region
          %s1629 = smul.u32 32, %s23
        $region64: #{tpu_custom_call.1} parent=47 // pred_fallthru
          _
      $region48: #{tpu_custom_call.1} parent=5 // pred_fallthru
        _
      %p1630 = scmp.le.s32.totalorder 2, %s18
      // Predicated region
      $region65: #{tpu_custom_call.1} parent=5 // pred_check
        %p1631 = pneg %p1630
      $region66: #{tpu_custom_call.1} parent=5 // pred_check_branch
        %1633 = sbr.rel (%p1631) target = $region68
      $region67: #{tpu_custom_call.1} parent=5 // pred_region
        %s1634 = ssub.s32 %s18, 2
        // Predicated region
        $region69: #{tpu_custom_call.1} parent=67 // pred_check
          %p1635 = pneg %p199
        $region70: #{tpu_custom_call.1} parent=67 // pred_check_branch
          %1637 = sbr.rel (%p1635) target = $region72
        $region71: #{tpu_custom_call.1} parent=67 // pred_region
          %s1638 = smul.u32 32, %s24
          %p1639 = scmp.lt.s32.totalorder %s1638, 63
          %s1640 = scalar_select %p1639, %s1638, 63
          %s1641 = smul.addr %s1640, 8
          %s1642 = scalar_lea.vmem %s7, %s1641
        $region72: #{tpu_custom_call.1} parent=67 // pred_fallthru
          _
      $region68: #{tpu_custom_call.1} parent=5 // pred_fallthru
        _
    $region6: #{tpu_custom_call.1} parent=1 // loop_footer
      %s22 = sadd.s32 1, %s18
    $region7: #{tpu_custom_call.1} parent=1 // loop_footer_branch
      %17 = sbr.rel target = $region3
    $region8: #{tpu_custom_call.1} parent=1 // loop_exit
      _
    %1643 = vsyncpa [#allocation4], 1
    %s1644 = scalar_lea.sflag [#allocation4], 1
    %1645 = vsyncpa %s1644, 1
    %1646 = vsyncpa [#allocation6], 1

</llo_original>
